<compile_context>
chip_gen: v7x
topology: tpu7x:2x2x1
jax: 0.10.0
libtpu: 0.0.40
codegen_flags: <defaults>
</compile_context>

<pallas_src>
import functools

import jax
import jax.numpy as jnp
from jax.experimental import pallas as pl
from jax.experimental.pallas import tpu as pltpu


# ---------------------------------------------------------------------------
# Pallas kernels
# ---------------------------------------------------------------------------
def _matmul_kernel(a_ref, b_ref, scale_ref, bias_ref, *rest, relu, has_res):
    """out = relu((A @ B) * scale + bias [+ residual]).  Grid = (M, N, K) tiles.

    A/B tiles are bf16 (MXU fast path); accumulation + epilogue are f32.
    """
    if has_res:
        res_ref, o_ref, acc_ref = rest
    else:
        res_ref = None
        o_ref, acc_ref = rest

    k = pl.program_id(2)

    @pl.when(k == 0)
    def _():
        acc_ref[...] = jnp.zeros_like(acc_ref)

    acc_ref[...] += jnp.dot(a_ref[...], b_ref[...],
                            preferred_element_type=jnp.float32)

    @pl.when(k == pl.num_programs(2) - 1)
    def _():
        out = acc_ref[...] * scale_ref[...] + bias_ref[...]
        if has_res:
            out = out + res_ref[...].astype(jnp.float32)
        if relu:
            out = jnp.maximum(out, 0.0)
        o_ref[...] = out.astype(o_ref.dtype)


def _maxpool_kernel(ee_ref, eo_ref, oe_ref, oo_ref, o_ref):
    """3x3 / stride-2 max-pool from the four (row,col)-parity grids of the
    padded input.  The nine window taps are unit-stride slices of the grids."""
    Ho, Wo = o_ref.shape[1], o_ref.shape[2]
    m = ee_ref[0, :Ho, :Wo, :]
    m = jnp.maximum(m, ee_ref[0, :Ho, 1:Wo + 1, :])
    m = jnp.maximum(m, ee_ref[0, 1:Ho + 1, :Wo, :])
    m = jnp.maximum(m, ee_ref[0, 1:Ho + 1, 1:Wo + 1, :])
    m = jnp.maximum(m, eo_ref[0, :Ho, :, :])
    m = jnp.maximum(m, eo_ref[0, 1:Ho + 1, :, :])
    m = jnp.maximum(m, oe_ref[0, :, :Wo, :])
    m = jnp.maximum(m, oe_ref[0, :, 1:Wo + 1, :])
    m = jnp.maximum(m, oo_ref[0])
    o_ref[0] = m


def _meanpool_kernel(x_ref, o_ref):
    # x_ref: (1, HW, C) -> mean over spatial positions, f32 accumulation.
    o_ref[...] = jnp.mean(x_ref[...].astype(jnp.float32), axis=1, keepdims=True)


# ---------------------------------------------------------------------------
# Pallas wrappers
# ---------------------------------------------------------------------------
def _pad2d(x, rows, cols):
    pr, pc = rows - x.shape[0], cols - x.shape[1]
    if pr == 0 and pc == 0:
        return x
    return jnp.pad(x, ((0, pr), (0, pc)))


def _choose_tk(k_dim):
    """Reduction tile: multiple of 128, minimal zero-padding, largest on ties."""
    cands = [(-(-k_dim // t) * t, -t) for t in (512, 384, 256, 128)]
    kp, neg_t = min(cands)
    return -neg_t, kp


@functools.partial(jax.jit, static_argnames=("relu", "out_dtype"))
def matmul_scale_bias(a, b, scale, bias, residual=None, *, relu=False,
                      out_dtype=jnp.bfloat16):
    """a: (M, K), b: (K, N), scale/bias: (N,), residual: optional (M, N)."""
    M, K = a.shape
    _, N = b.shape
    tk, Kp = _choose_tk(K)
    Np = -(-N // 128) * 128
    tn = 256 if Np % 256 == 0 else 128
    tm = min(512, -(-M // 8) * 8)
    Mp = -(-M // tm) * tm

    a_p = _pad2d(a.astype(jnp.bfloat16), Mp, Kp)
    b_p = _pad2d(b.astype(jnp.bfloat16), Kp, Np)
    s_p = _pad2d(scale.astype(jnp.float32).reshape(1, N), 1, Np)
    c_p = _pad2d(bias.astype(jnp.float32).reshape(1, N), 1, Np)

    has_res = residual is not None
    inputs = [a_p, b_p, s_p, c_p]
    in_specs = [
        pl.BlockSpec((tm, tk), lambda i, j, k: (i, k)),
        pl.BlockSpec((tk, tn), lambda i, j, k: (k, j)),
        pl.BlockSpec((1, tn), lambda i, j, k: (0, j)),
        pl.BlockSpec((1, tn), lambda i, j, k: (0, j)),
    ]
    if has_res:
        inputs.append(_pad2d(residual.astype(jnp.bfloat16), Mp, Np))
        in_specs.append(pl.BlockSpec((tm, tn), lambda i, j, k: (i, j)))

    out = pl.pallas_call(
        functools.partial(_matmul_kernel, relu=relu, has_res=has_res),
        out_shape=jax.ShapeDtypeStruct((Mp, Np), out_dtype),
        grid_spec=pltpu.PrefetchScalarGridSpec(
            num_scalar_prefetch=0,
            grid=(Mp // tm, Np // tn, Kp // tk),
            in_specs=in_specs,
            out_specs=pl.BlockSpec((tm, tn), lambda i, j, k: (i, j)),
            scratch_shapes=[pltpu.VMEM((tm, tn), jnp.float32)],
        ),
        compiler_params=pltpu.CompilerParams(
            dimension_semantics=("parallel", "parallel", "arbitrary")),
    )(*inputs)
    return out[:M, :N]


@jax.jit
def maxpool_3x3_s2(x):
    """3x3 / stride-2 / pad-1 max-pool on NHWC, no 9x patch materialization."""
    N, H, W, C = x.shape
    Ho, Wo = (H - 1) // 2 + 1, (W - 1) // 2 + 1
    xp = jnp.pad(x, ((0, 0), (1, 1), (1, 1), (0, 0)),
                 constant_values=-jnp.inf)
    ee = xp[:, 0::2, 0::2, :][:, :Ho + 1, :Wo + 1, :]
    eo = xp[:, 0::2, 1::2, :][:, :Ho + 1, :Wo, :]
    oe = xp[:, 1::2, 0::2, :][:, :Ho, :Wo + 1, :]
    oo = xp[:, 1::2, 1::2, :][:, :Ho, :Wo, :]
    return pl.pallas_call(
        _maxpool_kernel,
        out_shape=jax.ShapeDtypeStruct((N, Ho, Wo, C), x.dtype),
        grid=(N,),
        in_specs=[
            pl.BlockSpec((1, Ho + 1, Wo + 1, C), lambda n: (n, 0, 0, 0)),
            pl.BlockSpec((1, Ho + 1, Wo, C), lambda n: (n, 0, 0, 0)),
            pl.BlockSpec((1, Ho, Wo + 1, C), lambda n: (n, 0, 0, 0)),
            pl.BlockSpec((1, Ho, Wo, C), lambda n: (n, 0, 0, 0)),
        ],
        out_specs=pl.BlockSpec((1, Ho, Wo, C), lambda n: (n, 0, 0, 0)),
        compiler_params=pltpu.CompilerParams(
            dimension_semantics=("parallel",)),
    )(ee, eo, oe, oo)


@jax.jit
def mean_pool(x):
    """(N, HW, C) -> (N, C) global average pool, f32 output."""
    N, HW, C = x.shape
    out = pl.pallas_call(
        _meanpool_kernel,
        out_shape=jax.ShapeDtypeStruct((N, 1, C), jnp.float32),
        grid=(N,),
        in_specs=[pl.BlockSpec((1, HW, C), lambda n: (n, 0, 0))],
        out_specs=pl.BlockSpec((1, 1, C), lambda n: (n, 0, 0)),
        compiler_params=pltpu.CompilerParams(
            dimension_semantics=("parallel",)),
    )(x)
    return out[:, 0, :]


# ---------------------------------------------------------------------------
# JAX glue: im2col (bf16), conv+BN(+residual), bottleneck blocks
# ---------------------------------------------------------------------------
def im2col(x, kh, kw, stride, pad):
    """NHWC -> (N, Ho, Wo, kh*kw, C) patches, materialized in x.dtype (bf16)."""
    if pad > 0:
        x = jnp.pad(x, ((0, 0), (pad, pad), (pad, pad), (0, 0)))
    N, H, W, C = x.shape
    Ho = (H - kh) // stride + 1
    Wo = (W - kw) // stride + 1
    views = []
    for i in range(kh):
        for j in range(kw):
            views.append(x[:, i:i + stride * Ho:stride,
                           j:j + stride * Wo:stride, :])
    return jnp.stack(views, axis=3), Ho, Wo


@functools.partial(jax.jit, static_argnames=("stride", "pad", "relu"))
def conv_bn(x, w, bn, residual=None, *, stride, pad, relu):
    """x: NHWC, w: (Cout, Cin, kh, kw) (PyTorch layout).

    BN running stats are folded into per-channel scale/bias and fused into the
    matmul epilogue; optional residual-add + ReLU are fused as well.
    # TODO(synk): fold the kh*kw taps into the matmul K grid axis (shifted-window
    # A BlockSpec over the padded NHWC activation) so 3x3 convs need no im2col
    # patch materialization at all.
    """
    Cout, Cin, kh, kw = w.shape
    N = x.shape[0]
    xb = x.astype(jnp.bfloat16)
    if kh == 1 and kw == 1:
        if stride > 1:
            xb = xb[:, ::stride, ::stride, :]
        Ho, Wo = xb.shape[1], xb.shape[2]
        a = xb.reshape(N * Ho * Wo, Cin)
    else:
        p, Ho, Wo = im2col(xb, kh, kw, stride, pad)
        a = p.reshape(N * Ho * Wo, kh * kw * Cin)
    b = jnp.transpose(w, (2, 3, 1, 0)).reshape(kh * kw * Cin, Cout)
    scale = bn["gamma"] / jnp.sqrt(bn["var"] + 1e-5)
    bias = bn["beta"] - bn["mean"] * scale
    res2d = None if residual is None else residual.reshape(N * Ho * Wo, Cout)
    out = matmul_scale_bias(a, b, scale, bias, res2d, relu=relu)
    return out.reshape(N, Ho, Wo, Cout)


def bottleneck(x, prm, stride):
    if "downsample" in prm:
        identity = conv_bn(x, prm["downsample"]["conv"], prm["downsample"]["bn"],
                           stride=stride, pad=0, relu=False)
    else:
        identity = x
    out = conv_bn(x, prm["conv1"], prm["bn1"], stride=1, pad=0, relu=True)
    out = conv_bn(out, prm["conv2"], prm["bn2"], stride=stride, pad=1, relu=True)
    # conv3 + BN + residual add + ReLU fused in one matmul epilogue.
    out = conv_bn(out, prm["conv3"], prm["bn3"], identity,
                  stride=1, pad=0, relu=True)
    return out


def resnet50_forward(x_nchw, params):
    # layout: input is NCHW (PyTorch); transpose to NHWC for all kernels.
    x = jnp.transpose(x_nchw, (0, 2, 3, 1))
    x = conv_bn(x, params["conv1"], params["bn1"], stride=2, pad=3, relu=True)
    x = maxpool_3x3_s2(x)
    for name, stride in (("layer1", 1), ("layer2", 2),
                         ("layer3", 2), ("layer4", 2)):
        for bi, blk in enumerate(params[name]):
            x = bottleneck(x, blk, stride if bi == 0 else 1)
    N, H, W, C = x.shape
    feat = mean_pool(x.reshape(N, H * W, C))      # adaptive avgpool -> (N, 2048)
    # PyTorch: out1.squeeze() turns (N, 2048, 1, 1) into (N, 2048); already so.
    cls = params["fc_w"].shape[0]
    return matmul_scale_bias(feat, params["fc_w"].T,
                             jnp.ones((cls,), jnp.float32), params["fc_b"],
                             relu=False, out_dtype=jnp.float32)


# ---------------------------------------------------------------------------
# Deterministic synthetic parameters (same shapes as torchvision resnet50)
# ---------------------------------------------------------------------------
def make_params(cls=2, seed=0):
    keys = iter(jax.random.split(jax.random.PRNGKey(seed), 512))

    def conv_w(cout, cin, kh, kw):
        fan_in = cin * kh * kw
        return jax.random.normal(next(keys), (cout, cin, kh, kw),
                                 jnp.float32) * (2.0 / fan_in) ** 0.5

    def bn_p(c):
        k1, k2, k3, k4 = jax.random.split(next(keys), 4)
        return dict(
            gamma=1.0 + 0.1 * jax.random.normal(k1, (c,), jnp.float32),
            beta=0.1 * jax.random.normal(k2, (c,), jnp.float32),
            mean=0.1 * jax.random.normal(k3, (c,), jnp.float32),
            var=1.0 + 0.5 * jax.random.uniform(k4, (c,), jnp.float32),
        )

    p = {"conv1": conv_w(64, 3, 7, 7), "bn1": bn_p(64)}
    inplanes = 64
    cfg = [("layer1", 64, 3), ("layer2", 128, 4),
           ("layer3", 256, 6), ("layer4", 512, 3)]
    for name, planes, blocks in cfg:
        layer = []
        for b in range(blocks):
            blk = dict(
                conv1=conv_w(planes, inplanes, 1, 1), bn1=bn_p(planes),
                conv2=conv_w(planes, planes, 3, 3), bn2=bn_p(planes),
                conv3=conv_w(planes * 4, planes, 1, 1), bn3=bn_p(planes * 4),
            )
            if b == 0:
                blk["downsample"] = dict(conv=conv_w(planes * 4, inplanes, 1, 1),
                                         bn=bn_p(planes * 4))
            layer.append(blk)
            inplanes = planes * 4
        p[name] = layer
    p["fc_w"] = 0.05 * jax.random.normal(next(keys), (cls, 2048), jnp.float32)
    p["fc_b"] = 0.05 * jax.random.normal(next(keys), (cls,), jnp.float32)
    return p


# ---------------------------------------------------------------------------
if __name__ == "__main__":
    # Small ResNet-compatible input: batch=2, 3 channels, 32x32 spatial.
    # (After conv1/maxpool/layer2-4 downsampling -> 1x1 spatial before avgpool.)
    x = jax.random.normal(jax.random.PRNGKey(0), (2, 3, 32, 32), jnp.float32)
    params = make_params(cls=2, seed=0)

    out = resnet50_forward(x, params)
    out = jax.block_until_ready(out)
    assert out.shape == (2, 2), out.shape
    assert bool(jnp.all(jnp.isfinite(out)))
    print("KERNEL_OK")
</pallas_src>

<mosaic_0001>
module attributes {stable_mosaic.version = 11 : i64} {
  func.func @_matmul_kernel(%arg0: i32, %arg1: i32, %arg2: i32, %arg3: memref<512x256xbf16, #tpu.memory_space<vmem>>, %arg4: memref<256x128xbf16, #tpu.memory_space<vmem>>, %arg5: memref<1x128xf32, #tpu.memory_space<vmem>>, %arg6: memref<1x128xf32, #tpu.memory_space<vmem>>, %arg7: memref<512x128xbf16, #tpu.memory_space<vmem>>, %arg8: memref<512x128xf32, #tpu.memory_space<vmem>>) attributes {dimension_semantics = [#tpu.dimension_semantics<parallel>, #tpu.dimension_semantics<parallel>, #tpu.dimension_semantics<arbitrary>], iteration_bounds = array<i64: 1, 1, 1>, scalar_prefetch = 0 : i64, scratch_operands = 1 : i64, tpu.core_type = #tpu.core_type<tc>, window_params = [{transform_indices = @transform_0, window_bounds = array<i64: 512, 256>}, {transform_indices = @transform_1, window_bounds = array<i64: 256, 128>}, {transform_indices = @transform_2, window_bounds = array<i64: 1, 128>}, {transform_indices = @transform_3, window_bounds = array<i64: 1, 128>}, {transform_indices = @transform_4, window_bounds = array<i64: 512, 128>}]} {
    %c0_i32 = arith.constant 0 : i32
    %0 = arith.cmpi eq, %arg2, %c0_i32 : i32
    %1 = arith.extui %0 : i1 to i32
    %c0_i32_0 = arith.constant 0 : i32
    %2 = arith.cmpi ne, %1, %c0_i32_0 : i32
    scf.if %2 {
      %cst_10 = arith.constant 0.000000e+00 : f32
      %12 = vector.broadcast %cst_10 : f32 to vector<512x128xf32>
      %c0_11 = arith.constant 0 : index
      %c0_12 = arith.constant 0 : index
      %13 = vector.load %arg8[%c0_11, %c0_12] : memref<512x128xf32, #tpu.memory_space<vmem>>, vector<512x128xf32>
      tpu.vector_store %arg8[%c0_11, %c0_12], %12 {strides = array<i32>} : memref<512x128xf32, #tpu.memory_space<vmem>>, vector<512x128xf32>,
    } else {
    }
    %c0 = arith.constant 0 : index
    %c0_1 = arith.constant 0 : index
    %3 = vector.load %arg8[%c0, %c0_1] : memref<512x128xf32, #tpu.memory_space<vmem>>, vector<512x128xf32>
    %c0_2 = arith.constant 0 : index
    %c0_3 = arith.constant 0 : index
    %4 = vector.load %arg3[%c0_2, %c0_3] : memref<512x256xbf16, #tpu.memory_space<vmem>>, vector<512x256xbf16>
    %c0_4 = arith.constant 0 : index
    %c0_5 = arith.constant 0 : index
    %5 = vector.load %arg4[%c0_4, %c0_5] : memref<256x128xbf16, #tpu.memory_space<vmem>>, vector<256x128xbf16>
    %cst = arith.constant dense<0.000000e+00> : vector<512x128xf32>
    %6 = tpu.matmul %4, %5, %cst {dimension_numbers = #tpu.dot_dimension_numbers<[1], [0], [0], [1], [0, 0, 1, 1], [], []>} : vector<512x256xbf16>, vector<256x128xbf16>, vector<512x128xf32> -> vector<512x128xf32>
    %7 = arith.addf %3, %6 : vector<512x128xf32>
    %c0_6 = arith.constant 0 : index
    %c0_7 = arith.constant 0 : index
    %8 = vector.load %arg8[%c0_6, %c0_7] : memref<512x128xf32, #tpu.memory_space<vmem>>, vector<512x128xf32>
    tpu.vector_store %arg8[%c0_6, %c0_7], %7 {strides = array<i32>} : memref<512x128xf32, #tpu.memory_space<vmem>>, vector<512x128xf32>,
    %c0_i32_8 = arith.constant 0 : i32
    %9 = arith.cmpi eq, %arg2, %c0_i32_8 : i32
    %10 = arith.extui %9 : i1 to i32
    %c0_i32_9 = arith.constant 0 : i32
    %11 = arith.cmpi ne, %10, %c0_i32_9 : i32
    scf.if %11 {
      %c0_10 = arith.constant 0 : index
      %c0_11 = arith.constant 0 : index
      %12 = vector.load %arg8[%c0_10, %c0_11] : memref<512x128xf32, #tpu.memory_space<vmem>>, vector<512x128xf32>
      %c0_12 = arith.constant 0 : index
      %c0_13 = arith.constant 0 : index
      %13 = vector.load %arg5[%c0_12, %c0_13] : memref<1x128xf32, #tpu.memory_space<vmem>>, vector<1x128xf32>
      %14 = vector.broadcast %13 : vector<1x128xf32> to vector<512x128xf32>
      %15 = arith.mulf %12, %14 : vector<512x128xf32>
      %c0_14 = arith.constant 0 : index
      %c0_15 = arith.constant 0 : index
      %16 = vector.load %arg6[%c0_14, %c0_15] : memref<1x128xf32, #tpu.memory_space<vmem>>, vector<1x128xf32>
      %17 = vector.broadcast %16 : vector<1x128xf32> to vector<512x128xf32>
      %18 = arith.addf %15, %17 : vector<512x128xf32>
      %cst_16 = arith.constant 0.000000e+00 : f32
      %19 = vector.broadcast %cst_16 : f32 to vector<512x128xf32>
      %20 = arith.maximumf %18, %19 : vector<512x128xf32>
      %21 = arith.truncf %20 : vector<512x128xf32> to vector<512x128xbf16>
      %c0_17 = arith.constant 0 : index
      %c0_18 = arith.constant 0 : index
      %22 = vector.load %arg7[%c0_17, %c0_18] : memref<512x128xbf16, #tpu.memory_space<vmem>>, vector<512x128xbf16>
      tpu.vector_store %arg7[%c0_17, %c0_18], %21 {strides = array<i32>} : memref<512x128xbf16, #tpu.memory_space<vmem>>, vector<512x128xbf16>,
    } else {
    }
    return
  }
  func.func @transform_0(%arg0: i32, %arg1: i32, %arg2: i32) -> (i32, i32) {
    %c0_i32 = arith.constant 0 : i32
    return %arg0, %arg2 : i32, i32
  }
  func.func @transform_1(%arg0: i32, %arg1: i32, %arg2: i32) -> (i32, i32) {
    %c0_i32 = arith.constant 0 : i32
    return %arg2, %arg1 : i32, i32
  }
  func.func @transform_2(%arg0: i32, %arg1: i32, %arg2: i32) -> (i32, i32) {
    %c0_i32 = arith.constant 0 : i32
    %c0_i32_0 = arith.constant 0 : i32
    return %c0_i32, %arg1 : i32, i32
  }
  func.func @transform_3(%arg0: i32, %arg1: i32, %arg2: i32) -> (i32, i32) {
    %c0_i32 = arith.constant 0 : i32
    %c0_i32_0 = arith.constant 0 : i32
    return %c0_i32, %arg1 : i32, i32
  }
  func.func @transform_4(%arg0: i32, %arg1: i32, %arg2: i32) -> (i32, i32) {
    %c0_i32 = arith.constant 0 : i32
    return %arg0, %arg1 : i32, i32
  }
}

</mosaic_0001>

<llo_original>
// kernel: matmul_scale_bias.1
$region0: #{matmul_scale_bias.1}
  #allocation0 [shape = 'u32[]', space=smem, size = 0x4, offset = 0x4, fixed_abs, tag = 'smem constant byte address 0x4 - core index']
  #allocation1 [shape = 'u32[144,128]{1,0:T(1,128)}', space=vmem, size = 0x12000, scoped, tag = 'internal scratch']
  #allocation2 [shape = 'f32[512,128]{1,0:T(8,128)}', space=vmem, size = 0x40000, scoped, tag = 'scratch operand']
  %s0 = inlined_call_operand.vmem [shape: bf16[512,256], index: 0, kind: input, shape index: {}]
  %s1 = inlined_call_operand.vmem [shape: bf16[256,128], index: 1, kind: input, shape index: {}]
  %s2 = inlined_call_operand.vmem [shape: f32[1,128], index: 2, kind: input, shape index: {}]
  %s3 = inlined_call_operand.vmem [shape: f32[1,128], index: 3, kind: input, shape index: {}]
  %s4 = inlined_call_operand.vmem [shape: bf16[512,128], index: 4, kind: output, shape index: {}]
  %s5 = sld [smem:[#allocation0]]
  $region34: #{matmul_scale_bias.1} parent=0
    _
  %s7 = ssub.s32 1, %s5
  %s8 = scalar_select 0, %s7, %s5
  // Predicated region
  $region2: #{matmul_scale_bias.1} parent=0 // pred_check
    _
  $region3: #{matmul_scale_bias.1} parent=0 // pred_check_branch
    %10 = sbr.rel (0) target = $region5
  $region4: #{matmul_scale_bias.1} parent=0 // pred_region
    _
  $region5: #{matmul_scale_bias.1} parent=0 // pred_fallthru
    _
  // Predicated region
  $region6: #{matmul_scale_bias.1} parent=0 // pred_check
    _
  $region7: #{matmul_scale_bias.1} parent=0 // pred_check_branch
    %12 = sbr.rel (0) target = $region9
  $region8: #{matmul_scale_bias.1} parent=0 // pred_region
    _
  $region9: #{matmul_scale_bias.1} parent=0 // pred_fallthru
    _
  // Predicated region
  $region10: #{matmul_scale_bias.1} parent=0 // pred_check
    _
  $region11: #{matmul_scale_bias.1} parent=0 // pred_check_branch
    %14 = sbr.rel (0) target = $region13
  $region12: #{matmul_scale_bias.1} parent=0 // pred_region
    _
  $region13: #{matmul_scale_bias.1} parent=0 // pred_fallthru
    _
  // Predicated region
  $region14: #{matmul_scale_bias.1} parent=0 // pred_check
    _
  $region15: #{matmul_scale_bias.1} parent=0 // pred_check_branch
    %16 = sbr.rel (0) target = $region17
  $region16: #{matmul_scale_bias.1} parent=0 // pred_region
    _
  $region17: #{matmul_scale_bias.1} parent=0 // pred_fallthru
    _
  %p18 = scmp.eq.s32.totalorder 0, 0
  // Predicated region
  $region18: #{matmul_scale_bias.1} parent=0 // pred_check
    %p19 = pneg %p18
  $region19: #{matmul_scale_bias.1} parent=0 // pred_check_branch
    %21 = sbr.rel (%p19) target = $region21
  $region20: #{matmul_scale_bias.1} parent=0 // pred_region
    %22 = vst [vmem:[#allocation2] sm:$0xff] 0.0
    %23 = vst [vmem:[#allocation2 + $0x8] sm:$0xff] 0.0
    %24 = vst [vmem:[#allocation2 + $0x10] sm:$0xff] 0.0
    %25 = vst [vmem:[#allocation2 + $0x18] sm:$0xff] 0.0
    %26 = vst [vmem:[#allocation2 + $0x20] sm:$0xff] 0.0
    %27 = vst [vmem:[#allocation2 + $0x28] sm:$0xff] 0.0
    %28 = vst [vmem:[#allocation2 + $0x30] sm:$0xff] 0.0
    %29 = vst [vmem:[#allocation2 + $0x38] sm:$0xff] 0.0
    %30 = vst [vmem:[#allocation2 + $0x40] sm:$0xff] 0.0
    %31 = vst [vmem:[#allocation2 + $0x48] sm:$0xff] 0.0
    %32 = vst [vmem:[#allocation2 + $0x50] sm:$0xff] 0.0
    %33 = vst [vmem:[#allocation2 + $0x58] sm:$0xff] 0.0
    %34 = vst [vmem:[#allocation2 + $0x60] sm:$0xff] 0.0
    %35 = vst [vmem:[#allocation2 + $0x68] sm:$0xff] 0.0
    %36 = vst [vmem:[#allocation2 + $0x70] sm:$0xff] 0.0
    %37 = vst [vmem:[#allocation2 + $0x78] sm:$0xff] 0.0
    %38 = vst [vmem:[#allocation2 + $0x80] sm:$0xff] 0.0
    %39 = vst [vmem:[#allocation2 + $0x88] sm:$0xff] 0.0
    %40 = vst [vmem:[#allocation2 + $0x90] sm:$0xff] 0.0
    %41 = vst [vmem:[#allocation2 + $0x98] sm:$0xff] 0.0
    %42 = vst [vmem:[#allocation2 + $0xa0] sm:$0xff] 0.0
    %43 = vst [vmem:[#allocation2 + $0xa8] sm:$0xff] 0.0
    %44 = vst [vmem:[#allocation2 + $0xb0] sm:$0xff] 0.0
    %45 = vst [vmem:[#allocation2 + $0xb8] sm:$0xff] 0.0
    %46 = vst [vmem:[#allocation2 + $0xc0] sm:$0xff] 0.0
    %47 = vst [vmem:[#allocation2 + $0xc8] sm:$0xff] 0.0
    %48 = vst [vmem:[#allocation2 + $0xd0] sm:$0xff] 0.0
    %49 = vst [vmem:[#allocation2 + $0xd8] sm:$0xff] 0.0
    %50 = vst [vmem:[#allocation2 + $0xe0] sm:$0xff] 0.0
    %51 = vst [vmem:[#allocation2 + $0xe8] sm:$0xff] 0.0
    %52 = vst [vmem:[#allocation2 + $0xf0] sm:$0xff] 0.0
    %53 = vst [vmem:[#allocation2 + $0xf8] sm:$0xff] 0.0
    %54 = vst [vmem:[#allocation2 + $0x100] sm:$0xff] 0.0
    %55 = vst [vmem:[#allocation2 + $0x108] sm:$0xff] 0.0
    %56 = vst [vmem:[#allocation2 + $0x110] sm:$0xff] 0.0
    %57 = vst [vmem:[#allocation2 + $0x118] sm:$0xff] 0.0
    %58 = vst [vmem:[#allocation2 + $0x120] sm:$0xff] 0.0
    %59 = vst [vmem:[#allocation2 + $0x128] sm:$0xff] 0.0
    %60 = vst [vmem:[#allocation2 + $0x130] sm:$0xff] 0.0
    %61 = vst [vmem:[#allocation2 + $0x138] sm:$0xff] 0.0
    %62 = vst [vmem:[#allocation2 + $0x140] sm:$0xff] 0.0
    %63 = vst [vmem:[#allocation2 + $0x148] sm:$0xff] 0.0
    %64 = vst [vmem:[#allocation2 + $0x150] sm:$0xff] 0.0
    %65 = vst [vmem:[#allocation2 + $0x158] sm:$0xff] 0.0
    %66 = vst [vmem:[#allocation2 + $0x160] sm:$0xff] 0.0
    %67 = vst [vmem:[#allocation2 + $0x168] sm:$0xff] 0.0
    %68 = vst [vmem:[#allocation2 + $0x170] sm:$0xff] 0.0
    %69 = vst [vmem:[#allocation2 + $0x178] sm:$0xff] 0.0
    %70 = vst [vmem:[#allocation2 + $0x180] sm:$0xff] 0.0
    %71 = vst [vmem:[#allocation2 + $0x188] sm:$0xff] 0.0
    %72 = vst [vmem:[#allocation2 + $0x190] sm:$0xff] 0.0
    %73 = vst [vmem:[#allocation2 + $0x198] sm:$0xff] 0.0
    %74 = vst [vmem:[#allocation2 + $0x1a0] sm:$0xff] 0.0
    %75 = vst [vmem:[#allocation2 + $0x1a8] sm:$0xff] 0.0
    %76 = vst [vmem:[#allocation2 + $0x1b0] sm:$0xff] 0.0
    %77 = vst [vmem:[#allocation2 + $0x1b8] sm:$0xff] 0.0
    %78 = vst [vmem:[#allocation2 + $0x1c0] sm:$0xff] 0.0
    %79 = vst [vmem:[#allocation2 + $0x1c8] sm:$0xff] 0.0
    %80 = vst [vmem:[#allocation2 + $0x1d0] sm:$0xff] 0.0
    %81 = vst [vmem:[#allocation2 + $0x1d8] sm:$0xff] 0.0
    %82 = vst [vmem:[#allocation2 + $0x1e0] sm:$0xff] 0.0
    %83 = vst [vmem:[#allocation2 + $0x1e8] sm:$0xff] 0.0
    %84 = vst [vmem:[#allocation2 + $0x1f0] sm:$0xff] 0.0
    %85 = vst [vmem:[#allocation2 + $0x1f8] sm:$0xff] 0.0
  $region21: #{matmul_scale_bias.1} parent=0 // pred_fallthru
    _
  %v86 = vld [vmem:[#allocation2] sm:$0xff]
  %v87 = vld [vmem:[#allocation2 + $0x8] sm:$0xff]
  %v88 = vld [vmem:[#allocation2 + $0x10] sm:$0xff]
  %v89 = vld [vmem:[#allocation2 + $0x18] sm:$0xff]
  %v90 = vld [vmem:[#allocation2 + $0x20] sm:$0xff]
  %v91 = vld [vmem:[#allocation2 + $0x28] sm:$0xff]
  %v92 = vld [vmem:[#allocation2 + $0x30] sm:$0xff]
  %v93 = vld [vmem:[#allocation2 + $0x38] sm:$0xff]
  %v94 = vld [vmem:[#allocation2 + $0x40] sm:$0xff]
  %v95 = vld [vmem:[#allocation2 + $0x48] sm:$0xff]
  %v96 = vld [vmem:[#allocation2 + $0x50] sm:$0xff]
  %v97 = vld [vmem:[#allocation2 + $0x58] sm:$0xff]
  %v98 = vld [vmem:[#allocation2 + $0x60] sm:$0xff]
  %v99 = vld [vmem:[#allocation2 + $0x68] sm:$0xff]
  %v100 = vld [vmem:[#allocation2 + $0x70] sm:$0xff]
  %v101 = vld [vmem:[#allocation2 + $0x78] sm:$0xff]
  %v102 = vld [vmem:[#allocation2 + $0x80] sm:$0xff]
  %v103 = vld [vmem:[#allocation2 + $0x88] sm:$0xff]
  %v104 = vld [vmem:[#allocation2 + $0x90] sm:$0xff]
  %v105 = vld [vmem:[#allocation2 + $0x98] sm:$0xff]
  %v106 = vld [vmem:[#allocation2 + $0xa0] sm:$0xff]
  %v107 = vld [vmem:[#allocation2 + $0xa8] sm:$0xff]
  %v108 = vld [vmem:[#allocation2 + $0xb0] sm:$0xff]
  %v109 = vld [vmem:[#allocation2 + $0xb8] sm:$0xff]
  %v110 = vld [vmem:[#allocation2 + $0xc0] sm:$0xff]
  %v111 = vld [vmem:[#allocation2 + $0xc8] sm:$0xff]
  %v112 = vld [vmem:[#allocation2 + $0xd0] sm:$0xff]
  %v113 = vld [vmem:[#allocation2 + $0xd8] sm:$0xff]
  %v114 = vld [vmem:[#allocation2 + $0xe0] sm:$0xff]
  %v115 = vld [vmem:[#allocation2 + $0xe8] sm:$0xff]
  %v116 = vld [vmem:[#allocation2 + $0xf0] sm:$0xff]
  %v117 = vld [vmem:[#allocation2 + $0xf8] sm:$0xff]
  %v118 = vld [vmem:[#allocation2 + $0x100] sm:$0xff]
  %v119 = vld [vmem:[#allocation2 + $0x108] sm:$0xff]
  %v120 = vld [vmem:[#allocation2 + $0x110] sm:$0xff]
  %v121 = vld [vmem:[#allocation2 + $0x118] sm:$0xff]
  %v122 = vld [vmem:[#allocation2 + $0x120] sm:$0xff]
  %v123 = vld [vmem:[#allocation2 + $0x128] sm:$0xff]
  %v124 = vld [vmem:[#allocation2 + $0x130] sm:$0xff]
  %v125 = vld [vmem:[#allocation2 + $0x138] sm:$0xff]
  %v126 = vld [vmem:[#allocation2 + $0x140] sm:$0xff]
  %v127 = vld [vmem:[#allocation2 + $0x148] sm:$0xff]
  %v128 = vld [vmem:[#allocation2 + $0x150] sm:$0xff]
  %v129 = vld [vmem:[#allocation2 + $0x158] sm:$0xff]
  %v130 = vld [vmem:[#allocation2 + $0x160] sm:$0xff]
  %v131 = vld [vmem:[#allocation2 + $0x168] sm:$0xff]
  %v132 = vld [vmem:[#allocation2 + $0x170] sm:$0xff]
  %v133 = vld [vmem:[#allocation2 + $0x178] sm:$0xff]
  %v134 = vld [vmem:[#allocation2 + $0x180] sm:$0xff]
  %v135 = vld [vmem:[#allocation2 + $0x188] sm:$0xff]
  %v136 = vld [vmem:[#allocation2 + $0x190] sm:$0xff]
  %v137 = vld [vmem:[#allocation2 + $0x198] sm:$0xff]
  %v138 = vld [vmem:[#allocation2 + $0x1a0] sm:$0xff]
  %v139 = vld [vmem:[#allocation2 + $0x1a8] sm:$0xff]
  %v140 = vld [vmem:[#allocation2 + $0x1b0] sm:$0xff]
  %v141 = vld [vmem:[#allocation2 + $0x1b8] sm:$0xff]
  %v142 = vld [vmem:[#allocation2 + $0x1c0] sm:$0xff]
  %v143 = vld [vmem:[#allocation2 + $0x1c8] sm:$0xff]
  %v144 = vld [vmem:[#allocation2 + $0x1d0] sm:$0xff]
  %v145 = vld [vmem:[#allocation2 + $0x1d8] sm:$0xff]
  %v146 = vld [vmem:[#allocation2 + $0x1e0] sm:$0xff]
  %v147 = vld [vmem:[#allocation2 + $0x1e8] sm:$0xff]
  %v148 = vld [vmem:[#allocation2 + $0x1f0] sm:$0xff]
  %v149 = vld [vmem:[#allocation2 + $0x1f8] sm:$0xff]
  %v150 = vld [vmem:[%s0] sm:$0xff]
  %v151 = vld [vmem:[%s0 + $0x8] sm:$0xff]
  %v152 = vld [vmem:[%s0 + $0x10] sm:$0xff]
  %v153 = vld [vmem:[%s0 + $0x18] sm:$0xff]
  %v154 = vld [vmem:[%s0 + $0x20] sm:$0xff]
  %v155 = vld [vmem:[%s0 + $0x28] sm:$0xff]
  %v156 = vld [vmem:[%s0 + $0x30] sm:$0xff]
  %v157 = vld [vmem:[%s0 + $0x38] sm:$0xff]
  %v158 = vld [vmem:[%s0 + $0x40] sm:$0xff]
  %v159 = vld [vmem:[%s0 + $0x48] sm:$0xff]
  %v160 = vld [vmem:[%s0 + $0x50] sm:$0xff]
  %v161 = vld [vmem:[%s0 + $0x58] sm:$0xff]
  %v162 = vld [vmem:[%s0 + $0x60] sm:$0xff]
  %v163 = vld [vmem:[%s0 + $0x68] sm:$0xff]
  %v164 = vld [vmem:[%s0 + $0x70] sm:$0xff]
  %v165 = vld [vmem:[%s0 + $0x78] sm:$0xff]
  %v166 = vld [vmem:[%s0 + $0x80] sm:$0xff]
  %v167 = vld [vmem:[%s0 + $0x88] sm:$0xff]
  %v168 = vld [vmem:[%s0 + $0x90] sm:$0xff]
  %v169 = vld [vmem:[%s0 + $0x98] sm:$0xff]
  %v170 = vld [vmem:[%s0 + $0xa0] sm:$0xff]
  %v171 = vld [vmem:[%s0 + $0xa8] sm:$0xff]
  %v172 = vld [vmem:[%s0 + $0xb0] sm:$0xff]
  %v173 = vld [vmem:[%s0 + $0xb8] sm:$0xff]
  %v174 = vld [vmem:[%s0 + $0xc0] sm:$0xff]
  %v175 = vld [vmem:[%s0 + $0xc8] sm:$0xff]
  %v176 = vld [vmem:[%s0 + $0xd0] sm:$0xff]
  %v177 = vld [vmem:[%s0 + $0xd8] sm:$0xff]
  %v178 = vld [vmem:[%s0 + $0xe0] sm:$0xff]
  %v179 = vld [vmem:[%s0 + $0xe8] sm:$0xff]
  %v180 = vld [vmem:[%s0 + $0xf0] sm:$0xff]
  %v181 = vld [vmem:[%s0 + $0xf8] sm:$0xff]
  %v182 = vld [vmem:[%s0 + $0x100] sm:$0xff]
  %v183 = vld [vmem:[%s0 + $0x108] sm:$0xff]
  %v184 = vld [vmem:[%s0 + $0x110] sm:$0xff]
  %v185 = vld [vmem:[%s0 + $0x118] sm:$0xff]
  %v186 = vld [vmem:[%s0 + $0x120] sm:$0xff]
  %v187 = vld [vmem:[%s0 + $0x128] sm:$0xff]
  %v188 = vld [vmem:[%s0 + $0x130] sm:$0xff]
  %v189 = vld [vmem:[%s0 + $0x138] sm:$0xff]
  %v190 = vld [vmem:[%s0 + $0x140] sm:$0xff]
  %v191 = vld [vmem:[%s0 + $0x148] sm:$0xff]
  %v192 = vld [vmem:[%s0 + $0x150] sm:$0xff]
  %v193 = vld [vmem:[%s0 + $0x158] sm:$0xff]
  %v194 = vld [vmem:[%s0 + $0x160] sm:$0xff]
  %v195 = vld [vmem:[%s0 + $0x168] sm:$0xff]
  %v196 = vld [vmem:[%s0 + $0x170] sm:$0xff]
  %v197 = vld [vmem:[%s0 + $0x178] sm:$0xff]
  %v198 = vld [vmem:[%s0 + $0x180] sm:$0xff]
  %v199 = vld [vmem:[%s0 + $0x188] sm:$0xff]
  %v200 = vld [vmem:[%s0 + $0x190] sm:$0xff]
  %v201 = vld [vmem:[%s0 + $0x198] sm:$0xff]
  %v202 = vld [vmem:[%s0 + $0x1a0] sm:$0xff]
  %v203 = vld [vmem:[%s0 + $0x1a8] sm:$0xff]
  %v204 = vld [vmem:[%s0 + $0x1b0] sm:$0xff]
  %v205 = vld [vmem:[%s0 + $0x1b8] sm:$0xff]
  %v206 = vld [vmem:[%s0 + $0x1c0] sm:$0xff]
  %v207 = vld [vmem:[%s0 + $0x1c8] sm:$0xff]
  %v208 = vld [vmem:[%s0 + $0x1d0] sm:$0xff]
  %v209 = vld [vmem:[%s0 + $0x1d8] sm:$0xff]
  %v210 = vld [vmem:[%s0 + $0x1e0] sm:$0xff]
  %v211 = vld [vmem:[%s0 + $0x1e8] sm:$0xff]
  %v212 = vld [vmem:[%s0 + $0x1f0] sm:$0xff]
  %v213 = vld [vmem:[%s0 + $0x1f8] sm:$0xff]
  %v214 = vld [vmem:[%s1] sm:$0xf]
  %v215 = vld [vmem:[%s1 + $0x4] sm:$0xf]
  %v216 = vld [vmem:[%s1 + $0x8] sm:$0xf]
  %v217 = vld [vmem:[%s1 + $0xc] sm:$0xf]
  %v218 = vld [vmem:[%s1 + $0x10] sm:$0xf]
  %v219 = vld [vmem:[%s1 + $0x14] sm:$0xf]
  %v220 = vld [vmem:[%s1 + $0x18] sm:$0xf]
  %v221 = vld [vmem:[%s1 + $0x1c] sm:$0xf]
  %v222 = vld [vmem:[%s1 + $0x20] sm:$0xf]
  %v223 = vld [vmem:[%s1 + $0x24] sm:$0xf]
  %v224 = vld [vmem:[%s1 + $0x28] sm:$0xf]
  %v225 = vld [vmem:[%s1 + $0x2c] sm:$0xf]
  %v226 = vld [vmem:[%s1 + $0x30] sm:$0xf]
  %v227 = vld [vmem:[%s1 + $0x34] sm:$0xf]
  %v228 = vld [vmem:[%s1 + $0x38] sm:$0xf]
  %v229 = vld [vmem:[%s1 + $0x3c] sm:$0xf]
  %v230 = vld [vmem:[%s1 + $0x40] sm:$0xf]
  %v231 = vld [vmem:[%s1 + $0x44] sm:$0xf]
  %v232 = vld [vmem:[%s1 + $0x48] sm:$0xf]
  %v233 = vld [vmem:[%s1 + $0x4c] sm:$0xf]
  %v234 = vld [vmem:[%s1 + $0x50] sm:$0xf]
  %v235 = vld [vmem:[%s1 + $0x54] sm:$0xf]
  %v236 = vld [vmem:[%s1 + $0x58] sm:$0xf]
  %v237 = vld [vmem:[%s1 + $0x5c] sm:$0xf]
  %v238 = vld [vmem:[%s1 + $0x60] sm:$0xf]
  %v239 = vld [vmem:[%s1 + $0x64] sm:$0xf]
  %v240 = vld [vmem:[%s1 + $0x68] sm:$0xf]
  %v241 = vld [vmem:[%s1 + $0x6c] sm:$0xf]
  %v242 = vld [vmem:[%s1 + $0x70] sm:$0xf]
  %v243 = vld [vmem:[%s1 + $0x74] sm:$0xf]
  %v244 = vld [vmem:[%s1 + $0x78] sm:$0xf]
  %v245 = vld [vmem:[%s1 + $0x7c] sm:$0xf]
  %v310 = vunpack.c.l.b16 %v150
  %v311 = vunpack.c.h.b16 %v150
  %v312 = vunpack.c.l.b16 %v151
  %v313 = vunpack.c.h.b16 %v151
  %v314 = vunpack.c.l.b16 %v152
  %v315 = vunpack.c.h.b16 %v152
  %v316 = vunpack.c.l.b16 %v153
  %v317 = vunpack.c.h.b16 %v153
  %v318 = vunpack.c.l.b16 %v154
  %v319 = vunpack.c.h.b16 %v154
  %v320 = vunpack.c.l.b16 %v155
  %v321 = vunpack.c.h.b16 %v155
  %v322 = vunpack.c.l.b16 %v156
  %v323 = vunpack.c.h.b16 %v156
  %v324 = vunpack.c.l.b16 %v157
  %v325 = vunpack.c.h.b16 %v157
  %v326 = vunpack.c.l.b16 %v158
  %v327 = vunpack.c.h.b16 %v158
  %v328 = vunpack.c.l.b16 %v159
  %v329 = vunpack.c.h.b16 %v159
  %v330 = vunpack.c.l.b16 %v160
  %v331 = vunpack.c.h.b16 %v160
  %v332 = vunpack.c.l.b16 %v161
  %v333 = vunpack.c.h.b16 %v161
  %v334 = vunpack.c.l.b16 %v162
  %v335 = vunpack.c.h.b16 %v162
  %v336 = vunpack.c.l.b16 %v163
  %v337 = vunpack.c.h.b16 %v163
  %v338 = vunpack.c.l.b16 %v164
  %v339 = vunpack.c.h.b16 %v164
  %v340 = vunpack.c.l.b16 %v165
  %v341 = vunpack.c.h.b16 %v165
  %v342 = vunpack.c.l.b16 %v166
  %v343 = vunpack.c.h.b16 %v166
  %v344 = vunpack.c.l.b16 %v167
  %v345 = vunpack.c.h.b16 %v167
  %v346 = vunpack.c.l.b16 %v168
  %v347 = vunpack.c.h.b16 %v168
  %v348 = vunpack.c.l.b16 %v169
  %v349 = vunpack.c.h.b16 %v169
  %v350 = vunpack.c.l.b16 %v170
  %v351 = vunpack.c.h.b16 %v170
  %v352 = vunpack.c.l.b16 %v171
  %v353 = vunpack.c.h.b16 %v171
  %v354 = vunpack.c.l.b16 %v172
  %v355 = vunpack.c.h.b16 %v172
  %v356 = vunpack.c.l.b16 %v173
  %v357 = vunpack.c.h.b16 %v173
  %v358 = vunpack.c.l.b16 %v174
  %v359 = vunpack.c.h.b16 %v174
  %v360 = vunpack.c.l.b16 %v175
  %v361 = vunpack.c.h.b16 %v175
  %v362 = vunpack.c.l.b16 %v176
  %v363 = vunpack.c.h.b16 %v176
  %v364 = vunpack.c.l.b16 %v177
  %v365 = vunpack.c.h.b16 %v177
  %v366 = vunpack.c.l.b16 %v178
  %v367 = vunpack.c.h.b16 %v178
  %v368 = vunpack.c.l.b16 %v179
  %v369 = vunpack.c.h.b16 %v179
  %v370 = vunpack.c.l.b16 %v180
  %v371 = vunpack.c.h.b16 %v180
  %v372 = vunpack.c.l.b16 %v181
  %v373 = vunpack.c.h.b16 %v181
  %v374 = vunpack.c.l.b16 %v182
  %v375 = vunpack.c.h.b16 %v182
  %v376 = vunpack.c.l.b16 %v183
  %v377 = vunpack.c.h.b16 %v183
  %v378 = vunpack.c.l.b16 %v184
  %v379 = vunpack.c.h.b16 %v184
  %v380 = vunpack.c.l.b16 %v185
  %v381 = vunpack.c.h.b16 %v185
  %v382 = vunpack.c.l.b16 %v186
  %v383 = vunpack.c.h.b16 %v186
  %v384 = vunpack.c.l.b16 %v187
  %v385 = vunpack.c.h.b16 %v187
  %v386 = vunpack.c.l.b16 %v188
  %v387 = vunpack.c.h.b16 %v188
  %v388 = vunpack.c.l.b16 %v189
  %v389 = vunpack.c.h.b16 %v189
  %v390 = vunpack.c.l.b16 %v190
  %v391 = vunpack.c.h.b16 %v190
  %v392 = vunpack.c.l.b16 %v191
  %v393 = vunpack.c.h.b16 %v191
  %v394 = vunpack.c.l.b16 %v192
  %v395 = vunpack.c.h.b16 %v192
  %v396 = vunpack.c.l.b16 %v193
  %v397 = vunpack.c.h.b16 %v193
  %v398 = vunpack.c.l.b16 %v194
  %v399 = vunpack.c.h.b16 %v194
  %v400 = vunpack.c.l.b16 %v195
  %v401 = vunpack.c.h.b16 %v195
  %v402 = vunpack.c.l.b16 %v196
  %v403 = vunpack.c.h.b16 %v196
  %v404 = vunpack.c.l.b16 %v197
  %v405 = vunpack.c.h.b16 %v197
  %v406 = vunpack.c.l.b16 %v198
  %v407 = vunpack.c.h.b16 %v198
  %v408 = vunpack.c.l.b16 %v199
  %v409 = vunpack.c.h.b16 %v199
  %v410 = vunpack.c.l.b16 %v200
  %v411 = vunpack.c.h.b16 %v200
  %v412 = vunpack.c.l.b16 %v201
  %v413 = vunpack.c.h.b16 %v201
  %v414 = vunpack.c.l.b16 %v202
  %v415 = vunpack.c.h.b16 %v202
  %v416 = vunpack.c.l.b16 %v203
  %v417 = vunpack.c.h.b16 %v203
  %v418 = vunpack.c.l.b16 %v204
  %v419 = vunpack.c.h.b16 %v204
  %v420 = vunpack.c.l.b16 %v205
  %v421 = vunpack.c.h.b16 %v205
  %v422 = vunpack.c.l.b16 %v206
  %v423 = vunpack.c.h.b16 %v206
  %v424 = vunpack.c.l.b16 %v207
  %v425 = vunpack.c.h.b16 %v207
  %v426 = vunpack.c.l.b16 %v208
  %v427 = vunpack.c.h.b16 %v208
  %v428 = vunpack.c.l.b16 %v209
  %v429 = vunpack.c.h.b16 %v209
  %v430 = vunpack.c.l.b16 %v210
  %v431 = vunpack.c.h.b16 %v210
  %v432 = vunpack.c.l.b16 %v211
  %v433 = vunpack.c.h.b16 %v211
  %v434 = vunpack.c.l.b16 %v212
  %v435 = vunpack.c.h.b16 %v212
  %v436 = vunpack.c.l.b16 %v213
  %v437 = vunpack.c.h.b16 %v213
  %v438 = vpack.c.b16 %v312, %v310
  %v439 = vpack.c.b16 %v313, %v311
  %v440 = vpack.c.b16 %v316, %v314
  %v441 = vpack.c.b16 %v317, %v315
  %v442 = vpack.c.b16 %v320, %v318
  %v443 = vpack.c.b16 %v321, %v319
  %v444 = vpack.c.b16 %v324, %v322
  %v445 = vpack.c.b16 %v325, %v323
  %v446 = vpack.c.b16 %v328, %v326
  %v447 = vpack.c.b16 %v329, %v327
  %v448 = vpack.c.b16 %v332, %v330
  %v449 = vpack.c.b16 %v333, %v331
  %v450 = vpack.c.b16 %v336, %v334
  %v451 = vpack.c.b16 %v337, %v335
  %v452 = vpack.c.b16 %v340, %v338
  %v453 = vpack.c.b16 %v341, %v339
  %v454 = vpack.c.b16 %v344, %v342
  %v455 = vpack.c.b16 %v345, %v343
  %v456 = vpack.c.b16 %v348, %v346
  %v457 = vpack.c.b16 %v349, %v347
  %v458 = vpack.c.b16 %v352, %v350
  %v459 = vpack.c.b16 %v353, %v351
  %v460 = vpack.c.b16 %v356, %v354
  %v461 = vpack.c.b16 %v357, %v355
  %v462 = vpack.c.b16 %v360, %v358
  %v463 = vpack.c.b16 %v361, %v359
  %v464 = vpack.c.b16 %v364, %v362
  %v465 = vpack.c.b16 %v365, %v363
  %v466 = vpack.c.b16 %v368, %v366
  %v467 = vpack.c.b16 %v369, %v367
  %v468 = vpack.c.b16 %v372, %v370
  %v469 = vpack.c.b16 %v373, %v371
  %v470 = vpack.c.b16 %v376, %v374
  %v471 = vpack.c.b16 %v377, %v375
  %v472 = vpack.c.b16 %v380, %v378
  %v473 = vpack.c.b16 %v381, %v379
  %v474 = vpack.c.b16 %v384, %v382
  %v475 = vpack.c.b16 %v385, %v383
  %v476 = vpack.c.b16 %v388, %v386
  %v477 = vpack.c.b16 %v389, %v387
  %v478 = vpack.c.b16 %v392, %v390
  %v479 = vpack.c.b16 %v393, %v391
  %v480 = vpack.c.b16 %v396, %v394
  %v481 = vpack.c.b16 %v397, %v395
  %v482 = vpack.c.b16 %v400, %v398
  %v483 = vpack.c.b16 %v401, %v399
  %v484 = vpack.c.b16 %v404, %v402
  %v485 = vpack.c.b16 %v405, %v403
  %v486 = vpack.c.b16 %v408, %v406
  %v487 = vpack.c.b16 %v409, %v407
  %v488 = vpack.c.b16 %v412, %v410
  %v489 = vpack.c.b16 %v413, %v411
  %v490 = vpack.c.b16 %v416, %v414
  %v491 = vpack.c.b16 %v417, %v415
  %v492 = vpack.c.b16 %v420, %v418
  %v493 = vpack.c.b16 %v421, %v419
  %v494 = vpack.c.b16 %v424, %v422
  %v495 = vpack.c.b16 %v425, %v423
  %v496 = vpack.c.b16 %v428, %v426
  %v497 = vpack.c.b16 %v429, %v427
  %v498 = vpack.c.b16 %v432, %v430
  %v499 = vpack.c.b16 %v433, %v431
  %v500 = vpack.c.b16 %v436, %v434
  %v501 = vpack.c.b16 %v437, %v435
  %v598 = vunpack.c.l.b16 %v214
  %v599 = vunpack.c.l.b16 %v215
  %v600 = vunpack.c.l.b16 %v216
  %v601 = vunpack.c.l.b16 %v217
  %v602 = vunpack.c.l.b16 %v218
  %v603 = vunpack.c.l.b16 %v219
  %v604 = vunpack.c.l.b16 %v220
  %v605 = vunpack.c.l.b16 %v221
  %v606 = vunpack.c.l.b16 %v222
  %v607 = vunpack.c.l.b16 %v223
  %v608 = vunpack.c.l.b16 %v224
  %v609 = vunpack.c.l.b16 %v225
  %v610 = vunpack.c.l.b16 %v226
  %v611 = vunpack.c.l.b16 %v227
  %v612 = vunpack.c.l.b16 %v228
  %v613 = vunpack.c.l.b16 %v229
  %v614 = vunpack.c.l.b16 %v230
  %v615 = vunpack.c.l.b16 %v231
  %v616 = vunpack.c.l.b16 %v232
  %v617 = vunpack.c.l.b16 %v233
  %v618 = vunpack.c.l.b16 %v234
  %v619 = vunpack.c.l.b16 %v235
  %v620 = vunpack.c.l.b16 %v236
  %v621 = vunpack.c.l.b16 %v237
  %v622 = vunpack.c.l.b16 %v238
  %v623 = vunpack.c.l.b16 %v239
  %v624 = vunpack.c.l.b16 %v240
  %v625 = vunpack.c.l.b16 %v241
  %v626 = vunpack.c.l.b16 %v242
  %v627 = vunpack.c.l.b16 %v243
  %v628 = vunpack.c.l.b16 %v244
  %v629 = vunpack.c.l.b16 %v245
  %v630 = vpack.c.b16 %v599, %v598
  %v631 = vpack.c.b16 %v601, %v600
  %v632 = vpack.c.b16 %v603, %v602
  %v633 = vpack.c.b16 %v605, %v604
  %v634 = vpack.c.b16 %v607, %v606
  %v635 = vpack.c.b16 %v609, %v608
  %v636 = vpack.c.b16 %v611, %v610
  %v637 = vpack.c.b16 %v613, %v612
  %v638 = vpack.c.b16 %v615, %v614
  %v639 = vpack.c.b16 %v617, %v616
  %v640 = vpack.c.b16 %v619, %v618
  %v641 = vpack.c.b16 %v621, %v620
  %v642 = vpack.c.b16 %v623, %v622
  %v643 = vpack.c.b16 %v625, %v624
  %v644 = vpack.c.b16 %v627, %v626
  %v645 = vpack.c.b16 %v629, %v628
  %662 = vmatprep.subr.bf16.mxu0 0
  %663 = vmatpush1.bf16.msra.mxu0 %v630
  %664 = vmatprep.subr.bf16.mxu0 0
  %665 = vmatpush1.bf16.msra.mxu0 %v631
  %666 = vmatprep.subr.bf16.mxu0 0
  %667 = vmatpush1.bf16.msra.mxu0 %v632
  %668 = vmatprep.subr.bf16.mxu0 0
  %669 = vmatpush1.bf16.msra.mxu0 %v633
  %670 = vmatprep.subr.bf16.mxu0 0
  %671 = vmatpush1.bf16.msra.mxu0 %v634
  %672 = vmatprep.subr.bf16.mxu0 0
  %673 = vmatpush1.bf16.msra.mxu0 %v635
  %674 = vmatprep.subr.bf16.mxu0 0
  %675 = vmatpush1.bf16.msra.mxu0 %v636
  %676 = vmatprep.subr.bf16.mxu0 0
  %677 = vmatpush1.bf16.msra.mxu0 %v637
  %678 = vmatprep.subr.bf16.mxu0 0
  %679 = vmatpush1.bf16.msra.mxu0 %v638
  %680 = vmatprep.subr.bf16.mxu0 0
  %681 = vmatpush1.bf16.msra.mxu0 %v639
  %682 = vmatprep.subr.bf16.mxu0 0
  %683 = vmatpush1.bf16.msra.mxu0 %v640
  %684 = vmatprep.subr.bf16.mxu0 0
  %685 = vmatpush1.bf16.msra.mxu0 %v641
  %686 = vmatprep.subr.bf16.mxu0 0
  %687 = vmatpush1.bf16.msra.mxu0 %v642
  %688 = vmatprep.subr.bf16.mxu0 0
  %689 = vmatpush1.bf16.msra.mxu0 %v643
  %690 = vmatprep.subr.bf16.mxu0 0
  %691 = vmatpush1.bf16.msra.mxu0 %v644
  %692 = vmatprep.subr.bf16.mxu0 0
  %693 = vmatpush1.bf16.msra.mxu0 %v645
  %694 = vmatprep.mubr.bf16.mxu0 %v439
  %695 = vmatmul.mubr.bf16.gmra.mrb[0].mxu0 %v438
  %v696 = vpop.f32.mrb[0].mxu0
  %v697 = vadd.f32 0.0, %v696
  %v698 = vpop.f32.mrb[0].mxu0
  %v699 = vpop.f32.mrb[0].mxu0
  %v700 = vadd.f32 0.0, %v699
  %v701 = vpop.f32.mrb[0].mxu0
  %702 = vmatprep.mubr.bf16.mxu0 %v441
  %703 = vmatmul.mubr.bf16.gmra.mrb[0].mxu0 %v440
  %v704 = vpop.f32.mrb[0].mxu0
  %v705 = vadd.f32 0.0, %v704
  %v706 = vpop.f32.mrb[0].mxu0
  %v707 = vpop.f32.mrb[0].mxu0
  %v708 = vadd.f32 0.0, %v707
  %v709 = vpop.f32.mrb[0].mxu0
  %710 = vmatprep.mubr.bf16.mxu0 %v443
  %711 = vmatmul.mubr.bf16.gmra.mrb[0].mxu0 %v442
  %v712 = vpop.f32.mrb[0].mxu0
  %v713 = vadd.f32 0.0, %v712
  %v714 = vpop.f32.mrb[0].mxu0
  %v715 = vpop.f32.mrb[0].mxu0
  %v716 = vadd.f32 0.0, %v715
  %v717 = vpop.f32.mrb[0].mxu0
  %718 = vmatprep.mubr.bf16.mxu0 %v445
  %719 = vmatmul.mubr.bf16.gmra.mrb[0].mxu0 %v444
  %v720 = vpop.f32.mrb[0].mxu0
  %v721 = vadd.f32 0.0, %v720
  %v722 = vpop.f32.mrb[0].mxu0
  %v723 = vpop.f32.mrb[0].mxu0
  %v724 = vadd.f32 0.0, %v723
  %v725 = vpop.f32.mrb[0].mxu0
  %726 = vmatprep.mubr.bf16.mxu0 %v447
  %727 = vmatmul.mubr.bf16.gmra.mrb[0].mxu0 %v446
  %v728 = vpop.f32.mrb[0].mxu0
  %v729 = vadd.f32 0.0, %v728
  %v730 = vpop.f32.mrb[0].mxu0
  %v731 = vpop.f32.mrb[0].mxu0
  %v732 = vadd.f32 0.0, %v731
  %v733 = vpop.f32.mrb[0].mxu0
  %734 = vmatprep.mubr.bf16.mxu0 %v449
  %735 = vmatmul.mubr.bf16.gmra.mrb[0].mxu0 %v448
  %v736 = vpop.f32.mrb[0].mxu0
  %v737 = vadd.f32 0.0, %v736
  %v738 = vpop.f32.mrb[0].mxu0
  %v739 = vpop.f32.mrb[0].mxu0
  %v740 = vadd.f32 0.0, %v739
  %v741 = vpop.f32.mrb[0].mxu0
  %742 = vmatprep.mubr.bf16.mxu0 %v451
  %743 = vmatmul.mubr.bf16.gmra.mrb[0].mxu0 %v450
  %v744 = vpop.f32.mrb[0].mxu0
  %v745 = vadd.f32 0.0, %v744
  %v746 = vpop.f32.mrb[0].mxu0
  %v747 = vpop.f32.mrb[0].mxu0
  %v748 = vadd.f32 0.0, %v747
  %v749 = vpop.f32.mrb[0].mxu0
  %750 = vmatprep.mubr.bf16.mxu0 %v453
  %751 = vmatmul.mubr.bf16.gmra.mrb[0].mxu0 %v452
  %v752 = vpop.f32.mrb[0].mxu0
  %v753 = vadd.f32 0.0, %v752
  %v754 = vpop.f32.mrb[0].mxu0
  %v755 = vpop.f32.mrb[0].mxu0
  %v756 = vadd.f32 0.0, %v755
  %v757 = vpop.f32.mrb[0].mxu0
  %758 = vmatprep.mubr.bf16.mxu0 %v455
  %759 = vmatmul.mubr.bf16.gmra.mrb[0].mxu0 %v454
  %v760 = vpop.f32.mrb[0].mxu0
  %v761 = vadd.f32 0.0, %v760
  %v762 = vpop.f32.mrb[0].mxu0
  %v763 = vpop.f32.mrb[0].mxu0
  %v764 = vadd.f32 0.0, %v763
  %v765 = vpop.f32.mrb[0].mxu0
  %766 = vmatprep.mubr.bf16.mxu0 %v457
  %767 = vmatmul.mubr.bf16.gmra.mrb[0].mxu0 %v456
  %v768 = vpop.f32.mrb[0].mxu0
  %v769 = vadd.f32 0.0, %v768
  %v770 = vpop.f32.mrb[0].mxu0
  %v771 = vpop.f32.mrb[0].mxu0
  %v772 = vadd.f32 0.0, %v771
  %v773 = vpop.f32.mrb[0].mxu0
  %774 = vmatprep.mubr.bf16.mxu0 %v459
  %775 = vmatmul.mubr.bf16.gmra.mrb[0].mxu0 %v458
  %v776 = vpop.f32.mrb[0].mxu0
  %v777 = vadd.f32 0.0, %v776
  %v778 = vpop.f32.mrb[0].mxu0
  %v779 = vpop.f32.mrb[0].mxu0
  %v780 = vadd.f32 0.0, %v779
  %v781 = vpop.f32.mrb[0].mxu0
  %782 = vmatprep.mubr.bf16.mxu0 %v461
  %783 = vmatmul.mubr.bf16.gmra.mrb[0].mxu0 %v460
  %v784 = vpop.f32.mrb[0].mxu0
  %v785 = vadd.f32 0.0, %v784
  %v786 = vpop.f32.mrb[0].mxu0
  %v787 = vpop.f32.mrb[0].mxu0
  %v788 = vadd.f32 0.0, %v787
  %v789 = vpop.f32.mrb[0].mxu0
  %790 = vmatprep.mubr.bf16.mxu0 %v463
  %791 = vmatmul.mubr.bf16.gmra.mrb[0].mxu0 %v462
  %v792 = vpop.f32.mrb[0].mxu0
  %v793 = vadd.f32 0.0, %v792
  %v794 = vpop.f32.mrb[0].mxu0
  %v795 = vpop.f32.mrb[0].mxu0
  %v796 = vadd.f32 0.0, %v795
  %v797 = vpop.f32.mrb[0].mxu0
  %798 = vmatprep.mubr.bf16.mxu0 %v465
  %799 = vmatmul.mubr.bf16.gmra.mrb[0].mxu0 %v464
  %v800 = vpop.f32.mrb[0].mxu0
  %v801 = vadd.f32 0.0, %v800
  %v802 = vpop.f32.mrb[0].mxu0
  %v803 = vpop.f32.mrb[0].mxu0
  %v804 = vadd.f32 0.0, %v803
  %v805 = vpop.f32.mrb[0].mxu0
  %806 = vmatprep.mubr.bf16.mxu0 %v467
  %807 = vmatmul.mubr.bf16.gmra.mrb[0].mxu0 %v466
  %v808 = vpop.f32.mrb[0].mxu0
  %v809 = vadd.f32 0.0, %v808
  %v810 = vpop.f32.mrb[0].mxu0
  %v811 = vpop.f32.mrb[0].mxu0
  %v812 = vadd.f32 0.0, %v811
  %v813 = vpop.f32.mrb[0].mxu0
  %814 = vmatprep.mubr.bf16.mxu0 %v469
  %815 = vmatmul.mubr.bf16.gmra.mrb[0].mxu0 %v468
  %v816 = vpop.f32.mrb[0].mxu0
  %v817 = vadd.f32 0.0, %v816
  %v818 = vpop.f32.mrb[0].mxu0
  %v819 = vpop.f32.mrb[0].mxu0
  %v820 = vadd.f32 0.0, %v819
  %v821 = vpop.f32.mrb[0].mxu0
  %822 = vmatprep.mubr.bf16.mxu0 %v471
  %823 = vmatmul.mubr.bf16.gmra.mrb[0].mxu0 %v470
  %v824 = vpop.f32.mrb[0].mxu0
  %v825 = vadd.f32 0.0, %v824
  %v826 = vpop.f32.mrb[0].mxu0
  %v827 = vpop.f32.mrb[0].mxu0
  %v828 = vadd.f32 0.0, %v827
  %v829 = vpop.f32.mrb[0].mxu0
  %830 = vmatprep.mubr.bf16.mxu0 %v473
  %831 = vmatmul.mubr.bf16.gmra.mrb[0].mxu0 %v472
  %v832 = vpop.f32.mrb[0].mxu0
  %v833 = vadd.f32 0.0, %v832
  %v834 = vpop.f32.mrb[0].mxu0
  %v835 = vpop.f32.mrb[0].mxu0
  %v836 = vadd.f32 0.0, %v835
  %v837 = vpop.f32.mrb[0].mxu0
  %838 = vmatprep.mubr.bf16.mxu0 %v475
  %839 = vmatmul.mubr.bf16.gmra.mrb[0].mxu0 %v474
  %v840 = vpop.f32.mrb[0].mxu0
  %v841 = vadd.f32 0.0, %v840
  %v842 = vpop.f32.mrb[0].mxu0
  %v843 = vpop.f32.mrb[0].mxu0
  %v844 = vadd.f32 0.0, %v843
  %v845 = vpop.f32.mrb[0].mxu0
  %846 = vmatprep.mubr.bf16.mxu0 %v477
  %847 = vmatmul.mubr.bf16.gmra.mrb[0].mxu0 %v476
  %v848 = vpop.f32.mrb[0].mxu0
  %v849 = vadd.f32 0.0, %v848
  %v850 = vpop.f32.mrb[0].mxu0
  %v851 = vpop.f32.mrb[0].mxu0
  %v852 = vadd.f32 0.0, %v851
  %v853 = vpop.f32.mrb[0].mxu0
  %854 = vmatprep.mubr.bf16.mxu0 %v479
  %855 = vmatmul.mubr.bf16.gmra.mrb[0].mxu0 %v478
  %v856 = vpop.f32.mrb[0].mxu0
  %v857 = vadd.f32 0.0, %v856
  %v858 = vpop.f32.mrb[0].mxu0
  %v859 = vpop.f32.mrb[0].mxu0
  %v860 = vadd.f32 0.0, %v859
  %v861 = vpop.f32.mrb[0].mxu0
  %862 = vmatprep.mubr.bf16.mxu0 %v481
  %863 = vmatmul.mubr.bf16.gmra.mrb[0].mxu0 %v480
  %v864 = vpop.f32.mrb[0].mxu0
  %v865 = vadd.f32 0.0, %v864
  %v866 = vpop.f32.mrb[0].mxu0
  %v867 = vpop.f32.mrb[0].mxu0
  %v868 = vadd.f32 0.0, %v867
  %v869 = vpop.f32.mrb[0].mxu0
  %870 = vmatprep.mubr.bf16.mxu0 %v483
  %871 = vmatmul.mubr.bf16.gmra.mrb[0].mxu0 %v482
  %v872 = vpop.f32.mrb[0].mxu0
  %v873 = vadd.f32 0.0, %v872
  %v874 = vpop.f32.mrb[0].mxu0
  %v875 = vpop.f32.mrb[0].mxu0
  %v876 = vadd.f32 0.0, %v875
  %v877 = vpop.f32.mrb[0].mxu0
  %878 = vmatprep.mubr.bf16.mxu0 %v485
  %879 = vmatmul.mubr.bf16.gmra.mrb[0].mxu0 %v484
  %v880 = vpop.f32.mrb[0].mxu0
  %v881 = vadd.f32 0.0, %v880
  %v882 = vpop.f32.mrb[0].mxu0
  %v883 = vpop.f32.mrb[0].mxu0
  %v884 = vadd.f32 0.0, %v883
  %v885 = vpop.f32.mrb[0].mxu0
  %886 = vmatprep.mubr.bf16.mxu0 %v487
  %887 = vmatmul.mubr.bf16.gmra.mrb[0].mxu0 %v486
  %v888 = vpop.f32.mrb[0].mxu0
  %v889 = vadd.f32 0.0, %v888
  %v890 = vpop.f32.mrb[0].mxu0
  %v891 = vpop.f32.mrb[0].mxu0
  %v892 = vadd.f32 0.0, %v891
  %v893 = vpop.f32.mrb[0].mxu0
  %894 = vmatprep.mubr.bf16.mxu0 %v489
  %895 = vmatmul.mubr.bf16.gmra.mrb[0].mxu0 %v488
  %v896 = vpop.f32.mrb[0].mxu0
  %v897 = vadd.f32 0.0, %v896
  %v898 = vpop.f32.mrb[0].mxu0
  %v899 = vpop.f32.mrb[0].mxu0
  %v900 = vadd.f32 0.0, %v899
  %v901 = vpop.f32.mrb[0].mxu0
  %902 = vmatprep.mubr.bf16.mxu0 %v491
  %903 = vmatmul.mubr.bf16.gmra.mrb[0].mxu0 %v490
  %v904 = vpop.f32.mrb[0].mxu0
  %v905 = vadd.f32 0.0, %v904
  %v906 = vpop.f32.mrb[0].mxu0
  %v907 = vpop.f32.mrb[0].mxu0
  %v908 = vadd.f32 0.0, %v907
  %v909 = vpop.f32.mrb[0].mxu0
  %910 = vmatprep.mubr.bf16.mxu0 %v493
  %911 = vmatmul.mubr.bf16.gmra.mrb[0].mxu0 %v492
  %v912 = vpop.f32.mrb[0].mxu0
  %v913 = vadd.f32 0.0, %v912
  %v914 = vpop.f32.mrb[0].mxu0
  %v915 = vpop.f32.mrb[0].mxu0
  %v916 = vadd.f32 0.0, %v915
  %v917 = vpop.f32.mrb[0].mxu0
  %918 = vmatprep.mubr.bf16.mxu0 %v495
  %919 = vmatmul.mubr.bf16.gmra.mrb[0].mxu0 %v494
  %v920 = vpop.f32.mrb[0].mxu0
  %v921 = vadd.f32 0.0, %v920
  %v922 = vpop.f32.mrb[0].mxu0
  %v923 = vpop.f32.mrb[0].mxu0
  %v924 = vadd.f32 0.0, %v923
  %v925 = vpop.f32.mrb[0].mxu0
  %926 = vmatprep.mubr.bf16.mxu0 %v497
  %927 = vmatmul.mubr.bf16.gmra.mrb[0].mxu0 %v496
  %v928 = vpop.f32.mrb[0].mxu0
  %v929 = vadd.f32 0.0, %v928
  %v930 = vpop.f32.mrb[0].mxu0
  %v931 = vpop.f32.mrb[0].mxu0
  %v932 = vadd.f32 0.0, %v931
  %v933 = vpop.f32.mrb[0].mxu0
  %934 = vmatprep.mubr.bf16.mxu0 %v499
  %935 = vmatmul.mubr.bf16.gmra.mrb[0].mxu0 %v498
  %v936 = vpop.f32.mrb[0].mxu0
  %v937 = vadd.f32 0.0, %v936
  %v938 = vpop.f32.mrb[0].mxu0
  %v939 = vpop.f32.mrb[0].mxu0
  %v940 = vadd.f32 0.0, %v939
  %v941 = vpop.f32.mrb[0].mxu0
  %942 = vmatprep.mubr.bf16.mxu0 %v501
  %943 = vmatmul.mubr.bf16.gmra.mrb[0].mxu0 %v500
  %v944 = vpop.f32.mrb[0].mxu0
  %v945 = vadd.f32 0.0, %v944
  %v946 = vpop.f32.mrb[0].mxu0
  %v947 = vpop.f32.mrb[0].mxu0
  %v948 = vadd.f32 0.0, %v947
  %v949 = vpop.f32.mrb[0].mxu0
  %950 = vdwg.mxu0
  %v951 = vadd.f32 %v86, %v697
  %v952 = vadd.f32 %v87, %v700
  %v953 = vadd.f32 %v88, %v705
  %v954 = vadd.f32 %v89, %v708
  %v955 = vadd.f32 %v90, %v713
  %v956 = vadd.f32 %v91, %v716
  %v957 = vadd.f32 %v92, %v721
  %v958 = vadd.f32 %v93, %v724
  %v959 = vadd.f32 %v94, %v729
  %v960 = vadd.f32 %v95, %v732
  %v961 = vadd.f32 %v96, %v737
  %v962 = vadd.f32 %v97, %v740
  %v963 = vadd.f32 %v98, %v745
  %v964 = vadd.f32 %v99, %v748
  %v965 = vadd.f32 %v100, %v753
  %v966 = vadd.f32 %v101, %v756
  %v967 = vadd.f32 %v102, %v761
  %v968 = vadd.f32 %v103, %v764
  %v969 = vadd.f32 %v104, %v769
  %v970 = vadd.f32 %v105, %v772
  %v971 = vadd.f32 %v106, %v777
  %v972 = vadd.f32 %v107, %v780
  %v973 = vadd.f32 %v108, %v785
  %v974 = vadd.f32 %v109, %v788
  %v975 = vadd.f32 %v110, %v793
  %v976 = vadd.f32 %v111, %v796
  %v977 = vadd.f32 %v112, %v801
  %v978 = vadd.f32 %v113, %v804
  %v979 = vadd.f32 %v114, %v809
  %v980 = vadd.f32 %v115, %v812
  %v981 = vadd.f32 %v116, %v817
  %v982 = vadd.f32 %v117, %v820
  %v983 = vadd.f32 %v118, %v825
  %v984 = vadd.f32 %v119, %v828
  %v985 = vadd.f32 %v120, %v833
  %v986 = vadd.f32 %v121, %v836
  %v987 = vadd.f32 %v122, %v841
  %v988 = vadd.f32 %v123, %v844
  %v989 = vadd.f32 %v124, %v849
  %v990 = vadd.f32 %v125, %v852
  %v991 = vadd.f32 %v126, %v857
  %v992 = vadd.f32 %v127, %v860
  %v993 = vadd.f32 %v128, %v865
  %v994 = vadd.f32 %v129, %v868
  %v995 = vadd.f32 %v130, %v873
  %v996 = vadd.f32 %v131, %v876
  %v997 = vadd.f32 %v132, %v881
  %v998 = vadd.f32 %v133, %v884
  %v999 = vadd.f32 %v134, %v889
  %v1000 = vadd.f32 %v135, %v892
  %v1001 = vadd.f32 %v136, %v897
  %v1002 = vadd.f32 %v137, %v900
  %v1003 = vadd.f32 %v138, %v905
  %v1004 = vadd.f32 %v139, %v908
  %v1005 = vadd.f32 %v140, %v913
  %v1006 = vadd.f32 %v141, %v916
  %v1007 = vadd.f32 %v142, %v921
  %v1008 = vadd.f32 %v143, %v924
  %v1009 = vadd.f32 %v144, %v929
  %v1010 = vadd.f32 %v145, %v932
  %v1011 = vadd.f32 %v146, %v937
  %v1012 = vadd.f32 %v147, %v940
  %v1013 = vadd.f32 %v148, %v945
  %v1014 = vadd.f32 %v149, %v948
  %1015 = vst [vmem:[#allocation2] sm:$0xff] %v951
  %1016 = vst [vmem:[#allocation2 + $0x8] sm:$0xff] %v952
  %1017 = vst [vmem:[#allocation2 + $0x10] sm:$0xff] %v953
  %1018 = vst [vmem:[#allocation2 + $0x18] sm:$0xff] %v954
  %1019 = vst [vmem:[#allocation2 + $0x20] sm:$0xff] %v955
  %1020 = vst [vmem:[#allocation2 + $0x28] sm:$0xff] %v956
  %1021 = vst [vmem:[#allocation2 + $0x30] sm:$0xff] %v957
  %1022 = vst [vmem:[#allocation2 + $0x38] sm:$0xff] %v958
  %1023 = vst [vmem:[#allocation2 + $0x40] sm:$0xff] %v959
  %1024 = vst [vmem:[#allocation2 + $0x48] sm:$0xff] %v960
  %1025 = vst [vmem:[#allocation2 + $0x50] sm:$0xff] %v961
  %1026 = vst [vmem:[#allocation2 + $0x58] sm:$0xff] %v962
  %1027 = vst [vmem:[#allocation2 + $0x60] sm:$0xff] %v963
  %1028 = vst [vmem:[#allocation2 + $0x68] sm:$0xff] %v964
  %1029 = vst [vmem:[#allocation2 + $0x70] sm:$0xff] %v965
  %1030 = vst [vmem:[#allocation2 + $0x78] sm:$0xff] %v966
  %1031 = vst [vmem:[#allocation2 + $0x80] sm:$0xff] %v967
  %1032 = vst [vmem:[#allocation2 + $0x88] sm:$0xff] %v968
  %1033 = vst [vmem:[#allocation2 + $0x90] sm:$0xff] %v969
  %1034 = vst [vmem:[#allocation2 + $0x98] sm:$0xff] %v970
  %1035 = vst [vmem:[#allocation2 + $0xa0] sm:$0xff] %v971
  %1036 = vst [vmem:[#allocation2 + $0xa8] sm:$0xff] %v972
  %1037 = vst [vmem:[#allocation2 + $0xb0] sm:$0xff] %v973
  %1038 = vst [vmem:[#allocation2 + $0xb8] sm:$0xff] %v974
  %1039 = vst [vmem:[#allocation2 + $0xc0] sm:$0xff] %v975
  %1040 = vst [vmem:[#allocation2 + $0xc8] sm:$0xff] %v976
  %1041 = vst [vmem:[#allocation2 + $0xd0] sm:$0xff] %v977
  %1042 = vst [vmem:[#allocation2 + $0xd8] sm:$0xff] %v978
  %1043 = vst [vmem:[#allocation2 + $0xe0] sm:$0xff] %v979
  %1044 = vst [vmem:[#allocation2 + $0xe8] sm:$0xff] %v980
  %1045 = vst [vmem:[#allocation2 + $0xf0] sm:$0xff] %v981
  %1046 = vst [vmem:[#allocation2 + $0xf8] sm:$0xff] %v982
  %1047 = vst [vmem:[#allocation2 + $0x100] sm:$0xff] %v983
  %1048 = vst [vmem:[#allocation2 + $0x108] sm:$0xff] %v984
  %1049 = vst [vmem:[#allocation2 + $0x110] sm:$0xff] %v985
  %1050 = vst [vmem:[#allocation2 + $0x118] sm:$0xff] %v986
  %1051 = vst [vmem:[#allocation2 + $0x120] sm:$0xff] %v987
  %1052 = vst [vmem:[#allocation2 + $0x128] sm:$0xff] %v988
  %1053 = vst [vmem:[#allocation2 + $0x130] sm:$0xff] %v989
  %1054 = vst [vmem:[#allocation2 + $0x138] sm:$0xff] %v990
  %1055 = vst [vmem:[#allocation2 + $0x140] sm:$0xff] %v991
  %1056 = vst [vmem:[#allocation2 + $0x148] sm:$0xff] %v992
  %1057 = vst [vmem:[#allocation2 + $0x150] sm:$0xff] %v993
  %1058 = vst [vmem:[#allocation2 + $0x158] sm:$0xff] %v994
  %1059 = vst [vmem:[#allocation2 + $0x160] sm:$0xff] %v995
  %1060 = vst [vmem:[#allocation2 + $0x168] sm:$0xff] %v996
  %1061 = vst [vmem:[#allocation2 + $0x170] sm:$0xff] %v997
  %1062 = vst [vmem:[#allocation2 + $0x178] sm:$0xff] %v998
  %1063 = vst [vmem:[#allocation2 + $0x180] sm:$0xff] %v999
  %1064 = vst [vmem:[#allocation2 + $0x188] sm:$0xff] %v1000
  %1065 = vst [vmem:[#allocation2 + $0x190] sm:$0xff] %v1001
  %1066 = vst [vmem:[#allocation2 + $0x198] sm:$0xff] %v1002
  %1067 = vst [vmem:[#allocation2 + $0x1a0] sm:$0xff] %v1003
  %1068 = vst [vmem:[#allocation2 + $0x1a8] sm:$0xff] %v1004
  %1069 = vst [vmem:[#allocation2 + $0x1b0] sm:$0xff] %v1005
  %1070 = vst [vmem:[#allocation2 + $0x1b8] sm:$0xff] %v1006
  %1071 = vst [vmem:[#allocation2 + $0x1c0] sm:$0xff] %v1007
  %1072 = vst [vmem:[#allocation2 + $0x1c8] sm:$0xff] %v1008
  %1073 = vst [vmem:[#allocation2 + $0x1d0] sm:$0xff] %v1009
  %1074 = vst [vmem:[#allocation2 + $0x1d8] sm:$0xff] %v1010
  %1075 = vst [vmem:[#allocation2 + $0x1e0] sm:$0xff] %v1011
  %1076 = vst [vmem:[#allocation2 + $0x1e8] sm:$0xff] %v1012
  %1077 = vst [vmem:[#allocation2 + $0x1f0] sm:$0xff] %v1013
  %1078 = vst [vmem:[#allocation2 + $0x1f8] sm:$0xff] %v1014
  // Predicated region
  $region22: #{matmul_scale_bias.1} parent=0 // pred_check
    %p1079 = pneg %p18
  $region23: #{matmul_scale_bias.1} parent=0 // pred_check_branch
    %1081 = sbr.rel (%p1079) target = $region25
  $region24: #{matmul_scale_bias.1} parent=0 // pred_region
    %v1082 = vld [vmem:[#allocation2] sm:$0xff]
    %v1083 = vld [vmem:[#allocation2 + $0x8] sm:$0xff]
    %v1084 = vld [vmem:[#allocation2 + $0x10] sm:$0xff]
    %v1085 = vld [vmem:[#allocation2 + $0x18] sm:$0xff]
    %v1086 = vld [vmem:[#allocation2 + $0x20] sm:$0xff]
    %v1087 = vld [vmem:[#allocation2 + $0x28] sm:$0xff]
    %v1088 = vld [vmem:[#allocation2 + $0x30] sm:$0xff]
    %v1089 = vld [vmem:[#allocation2 + $0x38] sm:$0xff]
    %v1090 = vld [vmem:[#allocation2 + $0x40] sm:$0xff]
    %v1091 = vld [vmem:[#allocation2 + $0x48] sm:$0xff]
    %v1092 = vld [vmem:[#allocation2 + $0x50] sm:$0xff]
    %v1093 = vld [vmem:[#allocation2 + $0x58] sm:$0xff]
    %v1094 = vld [vmem:[#allocation2 + $0x60] sm:$0xff]
    %v1095 = vld [vmem:[#allocation2 + $0x68] sm:$0xff]
    %v1096 = vld [vmem:[#allocation2 + $0x70] sm:$0xff]
    %v1097 = vld [vmem:[#allocation2 + $0x78] sm:$0xff]
    %v1098 = vld [vmem:[#allocation2 + $0x80] sm:$0xff]
    %v1099 = vld [vmem:[#allocation2 + $0x88] sm:$0xff]
    %v1100 = vld [vmem:[#allocation2 + $0x90] sm:$0xff]
    %v1101 = vld [vmem:[#allocation2 + $0x98] sm:$0xff]
    %v1102 = vld [vmem:[#allocation2 + $0xa0] sm:$0xff]
    %v1103 = vld [vmem:[#allocation2 + $0xa8] sm:$0xff]
    %v1104 = vld [vmem:[#allocation2 + $0xb0] sm:$0xff]
    %v1105 = vld [vmem:[#allocation2 + $0xb8] sm:$0xff]
    %v1106 = vld [vmem:[#allocation2 + $0xc0] sm:$0xff]
    %v1107 = vld [vmem:[#allocation2 + $0xc8] sm:$0xff]
    %v1108 = vld [vmem:[#allocation2 + $0xd0] sm:$0xff]
    %v1109 = vld [vmem:[#allocation2 + $0xd8] sm:$0xff]
    %v1110 = vld [vmem:[#allocation2 + $0xe0] sm:$0xff]
    %v1111 = vld [vmem:[#allocation2 + $0xe8] sm:$0xff]
    %v1112 = vld [vmem:[#allocation2 + $0xf0] sm:$0xff]
    %v1113 = vld [vmem:[#allocation2 + $0xf8] sm:$0xff]
    %v1114 = vld [vmem:[#allocation2 + $0x100] sm:$0xff]
    %v1115 = vld [vmem:[#allocation2 + $0x108] sm:$0xff]
    %v1116 = vld [vmem:[#allocation2 + $0x110] sm:$0xff]
    %v1117 = vld [vmem:[#allocation2 + $0x118] sm:$0xff]
    %v1118 = vld [vmem:[#allocation2 + $0x120] sm:$0xff]
    %v1119 = vld [vmem:[#allocation2 + $0x128] sm:$0xff]
    %v1120 = vld [vmem:[#allocation2 + $0x130] sm:$0xff]
    %v1121 = vld [vmem:[#allocation2 + $0x138] sm:$0xff]
    %v1122 = vld [vmem:[#allocation2 + $0x140] sm:$0xff]
    %v1123 = vld [vmem:[#allocation2 + $0x148] sm:$0xff]
    %v1124 = vld [vmem:[#allocation2 + $0x150] sm:$0xff]
    %v1125 = vld [vmem:[#allocation2 + $0x158] sm:$0xff]
    %v1126 = vld [vmem:[#allocation2 + $0x160] sm:$0xff]
    %v1127 = vld [vmem:[#allocation2 + $0x168] sm:$0xff]
    %v1128 = vld [vmem:[#allocation2 + $0x170] sm:$0xff]
    %v1129 = vld [vmem:[#allocation2 + $0x178] sm:$0xff]
    %v1130 = vld [vmem:[#allocation2 + $0x180] sm:$0xff]
    %v1131 = vld [vmem:[#allocation2 + $0x188] sm:$0xff]
    %v1132 = vld [vmem:[#allocation2 + $0x190] sm:$0xff]
    %v1133 = vld [vmem:[#allocation2 + $0x198] sm:$0xff]
    %v1134 = vld [vmem:[#allocation2 + $0x1a0] sm:$0xff]
    %v1135 = vld [vmem:[#allocation2 + $0x1a8] sm:$0xff]
    %v1136 = vld [vmem:[#allocation2 + $0x1b0] sm:$0xff]
    %v1137 = vld [vmem:[#allocation2 + $0x1b8] sm:$0xff]
    %v1138 = vld [vmem:[#allocation2 + $0x1c0] sm:$0xff]
    %v1139 = vld [vmem:[#allocation2 + $0x1c8] sm:$0xff]
    %v1140 = vld [vmem:[#allocation2 + $0x1d0] sm:$0xff]
    %v1141 = vld [vmem:[#allocation2 + $0x1d8] sm:$0xff]
    %v1142 = vld [vmem:[#allocation2 + $0x1e0] sm:$0xff]
    %v1143 = vld [vmem:[#allocation2 + $0x1e8] sm:$0xff]
    %v1144 = vld [vmem:[#allocation2 + $0x1f0] sm:$0xff]
    %v1145 = vld [vmem:[#allocation2 + $0x1f8] sm:$0xff]
    %v1146 = vld [vmem:[%s2] sm:$0x1]
    %v1148 = vlaneseq
    %v1149 = vshrl.u32 %v1148, 7
    %v1150 = vsub.s32 0, %v1149
    %v1151 = vrot.slane %v1146, %v1150
    %v1153 = vmul.f32 %v1082, %v1151
    %v1154 = vmul.f32 %v1083, %v1151
    %v1155 = vmul.f32 %v1084, %v1151
    %v1156 = vmul.f32 %v1085, %v1151
    %v1157 = vmul.f32 %v1086, %v1151
    %v1158 = vmul.f32 %v1087, %v1151
    %v1159 = vmul.f32 %v1088, %v1151
    %v1160 = vmul.f32 %v1089, %v1151
    %v1161 = vmul.f32 %v1090, %v1151
    %v1162 = vmul.f32 %v1091, %v1151
    %v1163 = vmul.f32 %v1092, %v1151
    %v1164 = vmul.f32 %v1093, %v1151
    %v1165 = vmul.f32 %v1094, %v1151
    %v1166 = vmul.f32 %v1095, %v1151
    %v1167 = vmul.f32 %v1096, %v1151
    %v1168 = vmul.f32 %v1097, %v1151
    %v1169 = vmul.f32 %v1098, %v1151
    %v1170 = vmul.f32 %v1099, %v1151
    %v1171 = vmul.f32 %v1100, %v1151
    %v1172 = vmul.f32 %v1101, %v1151
    %v1173 = vmul.f32 %v1102, %v1151
    %v1174 = vmul.f32 %v1103, %v1151
    %v1175 = vmul.f32 %v1104, %v1151
    %v1176 = vmul.f32 %v1105, %v1151
    %v1177 = vmul.f32 %v1106, %v1151
    %v1178 = vmul.f32 %v1107, %v1151
    %v1179 = vmul.f32 %v1108, %v1151
    %v1180 = vmul.f32 %v1109, %v1151
    %v1181 = vmul.f32 %v1110, %v1151
    %v1182 = vmul.f32 %v1111, %v1151
    %v1183 = vmul.f32 %v1112, %v1151
    %v1184 = vmul.f32 %v1113, %v1151
    %v1185 = vmul.f32 %v1114, %v1151
    %v1186 = vmul.f32 %v1115, %v1151
    %v1187 = vmul.f32 %v1116, %v1151
    %v1188 = vmul.f32 %v1117, %v1151
    %v1189 = vmul.f32 %v1118, %v1151
    %v1190 = vmul.f32 %v1119, %v1151
    %v1191 = vmul.f32 %v1120, %v1151
    %v1192 = vmul.f32 %v1121, %v1151
    %v1193 = vmul.f32 %v1122, %v1151
    %v1194 = vmul.f32 %v1123, %v1151
    %v1195 = vmul.f32 %v1124, %v1151
    %v1196 = vmul.f32 %v1125, %v1151
    %v1197 = vmul.f32 %v1126, %v1151
    %v1198 = vmul.f32 %v1127, %v1151
    %v1199 = vmul.f32 %v1128, %v1151
    %v1200 = vmul.f32 %v1129, %v1151
    %v1201 = vmul.f32 %v1130, %v1151
    %v1202 = vmul.f32 %v1131, %v1151
    %v1203 = vmul.f32 %v1132, %v1151
    %v1204 = vmul.f32 %v1133, %v1151
    %v1205 = vmul.f32 %v1134, %v1151
    %v1206 = vmul.f32 %v1135, %v1151
    %v1207 = vmul.f32 %v1136, %v1151
    %v1208 = vmul.f32 %v1137, %v1151
    %v1209 = vmul.f32 %v1138, %v1151
    %v1210 = vmul.f32 %v1139, %v1151
    %v1211 = vmul.f32 %v1140, %v1151
    %v1212 = vmul.f32 %v1141, %v1151
    %v1213 = vmul.f32 %v1142, %v1151
    %v1214 = vmul.f32 %v1143, %v1151
    %v1215 = vmul.f32 %v1144, %v1151
    %v1216 = vmul.f32 %v1145, %v1151
    %v1217 = vld [vmem:[%s3] sm:$0x1]
    %v1219 = vlaneseq
    %v1220 = vshrl.u32 %v1219, 7
    %v1221 = vsub.s32 0, %v1220
    %v1222 = vrot.slane %v1217, %v1221
    %v1224 = vadd.f32 %v1153, %v1222
    %v1225 = vadd.f32 %v1154, %v1222
    %v1226 = vadd.f32 %v1155, %v1222
    %v1227 = vadd.f32 %v1156, %v1222
    %v1228 = vadd.f32 %v1157, %v1222
    %v1229 = vadd.f32 %v1158, %v1222
    %v1230 = vadd.f32 %v1159, %v1222
    %v1231 = vadd.f32 %v1160, %v1222
    %v1232 = vadd.f32 %v1161, %v1222
    %v1233 = vadd.f32 %v1162, %v1222
    %v1234 = vadd.f32 %v1163, %v1222
    %v1235 = vadd.f32 %v1164, %v1222
    %v1236 = vadd.f32 %v1165, %v1222
    %v1237 = vadd.f32 %v1166, %v1222
    %v1238 = vadd.f32 %v1167, %v1222
    %v1239 = vadd.f32 %v1168, %v1222
    %v1240 = vadd.f32 %v1169, %v1222
    %v1241 = vadd.f32 %v1170, %v1222
    %v1242 = vadd.f32 %v1171, %v1222
    %v1243 = vadd.f32 %v1172, %v1222
    %v1244 = vadd.f32 %v1173, %v1222
    %v1245 = vadd.f32 %v1174, %v1222
    %v1246 = vadd.f32 %v1175, %v1222
    %v1247 = vadd.f32 %v1176, %v1222
    %v1248 = vadd.f32 %v1177, %v1222
    %v1249 = vadd.f32 %v1178, %v1222
    %v1250 = vadd.f32 %v1179, %v1222
    %v1251 = vadd.f32 %v1180, %v1222
    %v1252 = vadd.f32 %v1181, %v1222
    %v1253 = vadd.f32 %v1182, %v1222
    %v1254 = vadd.f32 %v1183, %v1222
    %v1255 = vadd.f32 %v1184, %v1222
    %v1256 = vadd.f32 %v1185, %v1222
    %v1257 = vadd.f32 %v1186, %v1222
    %v1258 = vadd.f32 %v1187, %v1222
    %v1259 = vadd.f32 %v1188, %v1222
    %v1260 = vadd.f32 %v1189, %v1222
    %v1261 = vadd.f32 %v1190, %v1222
    %v1262 = vadd.f32 %v1191, %v1222
    %v1263 = vadd.f32 %v1192, %v1222
    %v1264 = vadd.f32 %v1193, %v1222
    %v1265 = vadd.f32 %v1194, %v1222
    %v1266 = vadd.f32 %v1195, %v1222
    %v1267 = vadd.f32 %v1196, %v1222
    %v1268 = vadd.f32 %v1197, %v1222
    %v1269 = vadd.f32 %v1198, %v1222
    %v1270 = vadd.f32 %v1199, %v1222
    %v1271 = vadd.f32 %v1200, %v1222
    %v1272 = vadd.f32 %v1201, %v1222
    %v1273 = vadd.f32 %v1202, %v1222
    %v1274 = vadd.f32 %v1203, %v1222
    %v1275 = vadd.f32 %v1204, %v1222
    %v1276 = vadd.f32 %v1205, %v1222
    %v1277 = vadd.f32 %v1206, %v1222
    %v1278 = vadd.f32 %v1207, %v1222
    %v1279 = vadd.f32 %v1208, %v1222
    %v1280 = vadd.f32 %v1209, %v1222
    %v1281 = vadd.f32 %v1210, %v1222
    %v1282 = vadd.f32 %v1211, %v1222
    %v1283 = vadd.f32 %v1212, %v1222
    %v1284 = vadd.f32 %v1213, %v1222
    %v1285 = vadd.f32 %v1214, %v1222
    %v1286 = vadd.f32 %v1215, %v1222
    %v1287 = vadd.f32 %v1216, %v1222
    %v1288 = vmax.f32 %v1224, 0.0
    %v1289 = vmax.f32 %v1225, 0.0
    %v1290 = vmax.f32 %v1226, 0.0
    %v1291 = vmax.f32 %v1227, 0.0
    %v1292 = vmax.f32 %v1228, 0.0
    %v1293 = vmax.f32 %v1229, 0.0
    %v1294 = vmax.f32 %v1230, 0.0
    %v1295 = vmax.f32 %v1231, 0.0
    %v1296 = vmax.f32 %v1232, 0.0
    %v1297 = vmax.f32 %v1233, 0.0
    %v1298 = vmax.f32 %v1234, 0.0
    %v1299 = vmax.f32 %v1235, 0.0
    %v1300 = vmax.f32 %v1236, 0.0
    %v1301 = vmax.f32 %v1237, 0.0
    %v1302 = vmax.f32 %v1238, 0.0
    %v1303 = vmax.f32 %v1239, 0.0
    %v1304 = vmax.f32 %v1240, 0.0
    %v1305 = vmax.f32 %v1241, 0.0
    %v1306 = vmax.f32 %v1242, 0.0
    %v1307 = vmax.f32 %v1243, 0.0
    %v1308 = vmax.f32 %v1244, 0.0
    %v1309 = vmax.f32 %v1245, 0.0
    %v1310 = vmax.f32 %v1246, 0.0
    %v1311 = vmax.f32 %v1247, 0.0
    %v1312 = vmax.f32 %v1248, 0.0
    %v1313 = vmax.f32 %v1249, 0.0
    %v1314 = vmax.f32 %v1250, 0.0
    %v1315 = vmax.f32 %v1251, 0.0
    %v1316 = vmax.f32 %v1252, 0.0
    %v1317 = vmax.f32 %v1253, 0.0
    %v1318 = vmax.f32 %v1254, 0.0
    %v1319 = vmax.f32 %v1255, 0.0
    %v1320 = vmax.f32 %v1256, 0.0
    %v1321 = vmax.f32 %v1257, 0.0
    %v1322 = vmax.f32 %v1258, 0.0
    %v1323 = vmax.f32 %v1259, 0.0
    %v1324 = vmax.f32 %v1260, 0.0
    %v1325 = vmax.f32 %v1261, 0.0
    %v1326 = vmax.f32 %v1262, 0.0
    %v1327 = vmax.f32 %v1263, 0.0
    %v1328 = vmax.f32 %v1264, 0.0
    %v1329 = vmax.f32 %v1265, 0.0
    %v1330 = vmax.f32 %v1266, 0.0
    %v1331 = vmax.f32 %v1267, 0.0
    %v1332 = vmax.f32 %v1268, 0.0
    %v1333 = vmax.f32 %v1269, 0.0
    %v1334 = vmax.f32 %v1270, 0.0
    %v1335 = vmax.f32 %v1271, 0.0
    %v1336 = vmax.f32 %v1272, 0.0
    %v1337 = vmax.f32 %v1273, 0.0
    %v1338 = vmax.f32 %v1274, 0.0
    %v1339 = vmax.f32 %v1275, 0.0
    %v1340 = vmax.f32 %v1276, 0.0
    %v1341 = vmax.f32 %v1277, 0.0
    %v1342 = vmax.f32 %v1278, 0.0
    %v1343 = vmax.f32 %v1279, 0.0
    %v1344 = vmax.f32 %v1280, 0.0
    %v1345 = vmax.f32 %v1281, 0.0
    %v1346 = vmax.f32 %v1282, 0.0
    %v1347 = vmax.f32 %v1283, 0.0
    %v1348 = vmax.f32 %v1284, 0.0
    %v1349 = vmax.f32 %v1285, 0.0
    %v1350 = vmax.f32 %v1286, 0.0
    %v1351 = vmax.f32 %v1287, 0.0
    %v1352 = vpack.c.bf16 %v1289, %v1288
    %v1353 = vpack.c.bf16 %v1291, %v1290
    %v1354 = vpack.c.bf16 %v1293, %v1292
    %v1355 = vpack.c.bf16 %v1295, %v1294
    %v1356 = vpack.c.bf16 %v1297, %v1296
    %v1357 = vpack.c.bf16 %v1299, %v1298
    %v1358 = vpack.c.bf16 %v1301, %v1300
    %v1359 = vpack.c.bf16 %v1303, %v1302
    %v1360 = vpack.c.bf16 %v1305, %v1304
    %v1361 = vpack.c.bf16 %v1307, %v1306
    %v1362 = vpack.c.bf16 %v1309, %v1308
    %v1363 = vpack.c.bf16 %v1311, %v1310
    %v1364 = vpack.c.bf16 %v1313, %v1312
    %v1365 = vpack.c.bf16 %v1315, %v1314
    %v1366 = vpack.c.bf16 %v1317, %v1316
    %v1367 = vpack.c.bf16 %v1319, %v1318
    %v1368 = vpack.c.bf16 %v1321, %v1320
    %v1369 = vpack.c.bf16 %v1323, %v1322
    %v1370 = vpack.c.bf16 %v1325, %v1324
    %v1371 = vpack.c.bf16 %v1327, %v1326
    %v1372 = vpack.c.bf16 %v1329, %v1328
    %v1373 = vpack.c.bf16 %v1331, %v1330
    %v1374 = vpack.c.bf16 %v1333, %v1332
    %v1375 = vpack.c.bf16 %v1335, %v1334
    %v1376 = vpack.c.bf16 %v1337, %v1336
    %v1377 = vpack.c.bf16 %v1339, %v1338
    %v1378 = vpack.c.bf16 %v1341, %v1340
    %v1379 = vpack.c.bf16 %v1343, %v1342
    %v1380 = vpack.c.bf16 %v1345, %v1344
    %v1381 = vpack.c.bf16 %v1347, %v1346
    %v1382 = vpack.c.bf16 %v1349, %v1348
    %v1383 = vpack.c.bf16 %v1351, %v1350
    %v1416 = vunpack.c.l.b16 %v1352
    %v1417 = vunpack.c.h.b16 %v1352
    %v1418 = vunpack.c.l.b16 %v1353
    %v1419 = vunpack.c.h.b16 %v1353
    %v1420 = vunpack.c.l.b16 %v1354
    %v1421 = vunpack.c.h.b16 %v1354
    %v1422 = vunpack.c.l.b16 %v1355
    %v1423 = vunpack.c.h.b16 %v1355
    %v1424 = vunpack.c.l.b16 %v1356
    %v1425 = vunpack.c.h.b16 %v1356
    %v1426 = vunpack.c.l.b16 %v1357
    %v1427 = vunpack.c.h.b16 %v1357
    %v1428 = vunpack.c.l.b16 %v1358
    %v1429 = vunpack.c.h.b16 %v1358
    %v1430 = vunpack.c.l.b16 %v1359
    %v1431 = vunpack.c.h.b16 %v1359
    %v1432 = vunpack.c.l.b16 %v1360
    %v1433 = vunpack.c.h.b16 %v1360
    %v1434 = vunpack.c.l.b16 %v1361
    %v1435 = vunpack.c.h.b16 %v1361
    %v1436 = vunpack.c.l.b16 %v1362
    %v1437 = vunpack.c.h.b16 %v1362
    %v1438 = vunpack.c.l.b16 %v1363
    %v1439 = vunpack.c.h.b16 %v1363
    %v1440 = vunpack.c.l.b16 %v1364
    %v1441 = vunpack.c.h.b16 %v1364
    %v1442 = vunpack.c.l.b16 %v1365
    %v1443 = vunpack.c.h.b16 %v1365
    %v1444 = vunpack.c.l.b16 %v1366
    %v1445 = vunpack.c.h.b16 %v1366
    %v1446 = vunpack.c.l.b16 %v1367
    %v1447 = vunpack.c.h.b16 %v1367
    %v1448 = vunpack.c.l.b16 %v1368
    %v1449 = vunpack.c.h.b16 %v1368
    %v1450 = vunpack.c.l.b16 %v1369
    %v1451 = vunpack.c.h.b16 %v1369
    %v1452 = vunpack.c.l.b16 %v1370
    %v1453 = vunpack.c.h.b16 %v1370
    %v1454 = vunpack.c.l.b16 %v1371
    %v1455 = vunpack.c.h.b16 %v1371
    %v1456 = vunpack.c.l.b16 %v1372
    %v1457 = vunpack.c.h.b16 %v1372
    %v1458 = vunpack.c.l.b16 %v1373
    %v1459 = vunpack.c.h.b16 %v1373
    %v1460 = vunpack.c.l.b16 %v1374
    %v1461 = vunpack.c.h.b16 %v1374
    %v1462 = vunpack.c.l.b16 %v1375
    %v1463 = vunpack.c.h.b16 %v1375
    %v1464 = vunpack.c.l.b16 %v1376
    %v1465 = vunpack.c.h.b16 %v1376
    %v1466 = vunpack.c.l.b16 %v1377
    %v1467 = vunpack.c.h.b16 %v1377
    %v1468 = vunpack.c.l.b16 %v1378
    %v1469 = vunpack.c.h.b16 %v1378
    %v1470 = vunpack.c.l.b16 %v1379
    %v1471 = vunpack.c.h.b16 %v1379
    %v1472 = vunpack.c.l.b16 %v1380
    %v1473 = vunpack.c.h.b16 %v1380
    %v1474 = vunpack.c.l.b16 %v1381
    %v1475 = vunpack.c.h.b16 %v1381
    %v1476 = vunpack.c.l.b16 %v1382
    %v1477 = vunpack.c.h.b16 %v1382
    %v1478 = vunpack.c.l.b16 %v1383
    %v1479 = vunpack.c.h.b16 %v1383
    %v1480 = vpack.c.b16 %v1416, %v1416
    %v1481 = vpack.c.b16 %v1417, %v1417
    %v1482 = vpack.c.b16 %v1418, %v1418
    %v1483 = vpack.c.b16 %v1419, %v1419
    %v1484 = vpack.c.b16 %v1420, %v1420
    %v1485 = vpack.c.b16 %v1421, %v1421
    %v1486 = vpack.c.b16 %v1422, %v1422
    %v1487 = vpack.c.b16 %v1423, %v1423
    %v1488 = vpack.c.b16 %v1424, %v1424
    %v1489 = vpack.c.b16 %v1425, %v1425
    %v1490 = vpack.c.b16 %v1426, %v1426
    %v1491 = vpack.c.b16 %v1427, %v1427
    %v1492 = vpack.c.b16 %v1428, %v1428
    %v1493 = vpack.c.b16 %v1429, %v1429
    %v1494 = vpack.c.b16 %v1430, %v1430
    %v1495 = vpack.c.b16 %v1431, %v1431
    %v1496 = vpack.c.b16 %v1432, %v1432
    %v1497 = vpack.c.b16 %v1433, %v1433
    %v1498 = vpack.c.b16 %v1434, %v1434
    %v1499 = vpack.c.b16 %v1435, %v1435
    %v1500 = vpack.c.b16 %v1436, %v1436
    %v1501 = vpack.c.b16 %v1437, %v1437
    %v1502 = vpack.c.b16 %v1438, %v1438
    %v1503 = vpack.c.b16 %v1439, %v1439
    %v1504 = vpack.c.b16 %v1440, %v1440
    %v1505 = vpack.c.b16 %v1441, %v1441
    %v1506 = vpack.c.b16 %v1442, %v1442
    %v1507 = vpack.c.b16 %v1443, %v1443
    %v1508 = vpack.c.b16 %v1444, %v1444
    %v1509 = vpack.c.b16 %v1445, %v1445
    %v1510 = vpack.c.b16 %v1446, %v1446
    %v1511 = vpack.c.b16 %v1447, %v1447
    %v1512 = vpack.c.b16 %v1448, %v1448
    %v1513 = vpack.c.b16 %v1449, %v1449
    %v1514 = vpack.c.b16 %v1450, %v1450
    %v1515 = vpack.c.b16 %v1451, %v1451
    %v1516 = vpack.c.b16 %v1452, %v1452
    %v1517 = vpack.c.b16 %v1453, %v1453
    %v1518 = vpack.c.b16 %v1454, %v1454
    %v1519 = vpack.c.b16 %v1455, %v1455
    %v1520 = vpack.c.b16 %v1456, %v1456
    %v1521 = vpack.c.b16 %v1457, %v1457
    %v1522 = vpack.c.b16 %v1458, %v1458
    %v1523 = vpack.c.b16 %v1459, %v1459
    %v1524 = vpack.c.b16 %v1460, %v1460
    %v1525 = vpack.c.b16 %v1461, %v1461
    %v1526 = vpack.c.b16 %v1462, %v1462
    %v1527 = vpack.c.b16 %v1463, %v1463
    %v1528 = vpack.c.b16 %v1464, %v1464
    %v1529 = vpack.c.b16 %v1465, %v1465
    %v1530 = vpack.c.b16 %v1466, %v1466
    %v1531 = vpack.c.b16 %v1467, %v1467
    %v1532 = vpack.c.b16 %v1468, %v1468
    %v1533 = vpack.c.b16 %v1469, %v1469
    %v1534 = vpack.c.b16 %v1470, %v1470
    %v1535 = vpack.c.b16 %v1471, %v1471
    %v1536 = vpack.c.b16 %v1472, %v1472
    %v1537 = vpack.c.b16 %v1473, %v1473
    %v1538 = vpack.c.b16 %v1474, %v1474
    %v1539 = vpack.c.b16 %v1475, %v1475
    %v1540 = vpack.c.b16 %v1476, %v1476
    %v1541 = vpack.c.b16 %v1477, %v1477
    %v1542 = vpack.c.b16 %v1478, %v1478
    %v1543 = vpack.c.b16 %v1479, %v1479
    %1608 = vst [vmem:[%s4] sm:$0xf] %v1480
    %1609 = vst [vmem:[%s4 + $0x4] sm:$0xf] %v1481
    %1610 = vst [vmem:[%s4 + $0x8] sm:$0xf] %v1482
    %1611 = vst [vmem:[%s4 + $0xc] sm:$0xf] %v1483
    %1612 = vst [vmem:[%s4 + $0x10] sm:$0xf] %v1484
    %1613 = vst [vmem:[%s4 + $0x14] sm:$0xf] %v1485
    %1614 = vst [vmem:[%s4 + $0x18] sm:$0xf] %v1486
    %1615 = vst [vmem:[%s4 + $0x1c] sm:$0xf] %v1487
    %1616 = vst [vmem:[%s4 + $0x20] sm:$0xf] %v1488
    %1617 = vst [vmem:[%s4 + $0x24] sm:$0xf] %v1489
    %1618 = vst [vmem:[%s4 + $0x28] sm:$0xf] %v1490
    %1619 = vst [vmem:[%s4 + $0x2c] sm:$0xf] %v1491
    %1620 = vst [vmem:[%s4 + $0x30] sm:$0xf] %v1492
    %1621 = vst [vmem:[%s4 + $0x34] sm:$0xf] %v1493
    %1622 = vst [vmem:[%s4 + $0x38] sm:$0xf] %v1494
    %1623 = vst [vmem:[%s4 + $0x3c] sm:$0xf] %v1495
    %1624 = vst [vmem:[%s4 + $0x40] sm:$0xf] %v1496
    %1625 = vst [vmem:[%s4 + $0x44] sm:$0xf] %v1497
    %1626 = vst [vmem:[%s4 + $0x48] sm:$0xf] %v1498
    %1627 = vst [vmem:[%s4 + $0x4c] sm:$0xf] %v1499
    %1628 = vst [vmem:[%s4 + $0x50] sm:$0xf] %v1500
    %1629 = vst [vmem:[%s4 + $0x54] sm:$0xf] %v1501
    %1630 = vst [vmem:[%s4 + $0x58] sm:$0xf] %v1502
    %1631 = vst [vmem:[%s4 + $0x5c] sm:$0xf] %v1503
    %1632 = vst [vmem:[%s4 + $0x60] sm:$0xf] %v1504
    %1633 = vst [vmem:[%s4 + $0x64] sm:$0xf] %v1505
    %1634 = vst [vmem:[%s4 + $0x68] sm:$0xf] %v1506
    %1635 = vst [vmem:[%s4 + $0x6c] sm:$0xf] %v1507
    %1636 = vst [vmem:[%s4 + $0x70] sm:$0xf] %v1508
    %1637 = vst [vmem:[%s4 + $0x74] sm:$0xf] %v1509
    %1638 = vst [vmem:[%s4 + $0x78] sm:$0xf] %v1510
    %1639 = vst [vmem:[%s4 + $0x7c] sm:$0xf] %v1511
    %1640 = vst [vmem:[%s4 + $0x80] sm:$0xf] %v1512
    %1641 = vst [vmem:[%s4 + $0x84] sm:$0xf] %v1513
    %1642 = vst [vmem:[%s4 + $0x88] sm:$0xf] %v1514
    %1643 = vst [vmem:[%s4 + $0x8c] sm:$0xf] %v1515
    %1644 = vst [vmem:[%s4 + $0x90] sm:$0xf] %v1516
    %1645 = vst [vmem:[%s4 + $0x94] sm:$0xf] %v1517
    %1646 = vst [vmem:[%s4 + $0x98] sm:$0xf] %v1518
    %1647 = vst [vmem:[%s4 + $0x9c] sm:$0xf] %v1519
    %1648 = vst [vmem:[%s4 + $0xa0] sm:$0xf] %v1520
    %1649 = vst [vmem:[%s4 + $0xa4] sm:$0xf] %v1521
    %1650 = vst [vmem:[%s4 + $0xa8] sm:$0xf] %v1522
    %1651 = vst [vmem:[%s4 + $0xac] sm:$0xf] %v1523
    %1652 = vst [vmem:[%s4 + $0xb0] sm:$0xf] %v1524
    %1653 = vst [vmem:[%s4 + $0xb4] sm:$0xf] %v1525
    %1654 = vst [vmem:[%s4 + $0xb8] sm:$0xf] %v1526
    %1655 = vst [vmem:[%s4 + $0xbc] sm:$0xf] %v1527
    %1656 = vst [vmem:[%s4 + $0xc0] sm:$0xf] %v1528
    %1657 = vst [vmem:[%s4 + $0xc4] sm:$0xf] %v1529
    %1658 = vst [vmem:[%s4 + $0xc8] sm:$0xf] %v1530
    %1659 = vst [vmem:[%s4 + $0xcc] sm:$0xf] %v1531
    %1660 = vst [vmem:[%s4 + $0xd0] sm:$0xf] %v1532
    %1661 = vst [vmem:[%s4 + $0xd4] sm:$0xf] %v1533
    %1662 = vst [vmem:[%s4 + $0xd8] sm:$0xf] %v1534
    %1663 = vst [vmem:[%s4 + $0xdc] sm:$0xf] %v1535
    %1664 = vst [vmem:[%s4 + $0xe0] sm:$0xf] %v1536
    %1665 = vst [vmem:[%s4 + $0xe4] sm:$0xf] %v1537
    %1666 = vst [vmem:[%s4 + $0xe8] sm:$0xf] %v1538
    %1667 = vst [vmem:[%s4 + $0xec] sm:$0xf] %v1539
    %1668 = vst [vmem:[%s4 + $0xf0] sm:$0xf] %v1540
    %1669 = vst [vmem:[%s4 + $0xf4] sm:$0xf] %v1541
    %1670 = vst [vmem:[%s4 + $0xf8] sm:$0xf] %v1542
    %1671 = vst [vmem:[%s4 + $0xfc] sm:$0xf] %v1543
  $region25: #{matmul_scale_bias.1} parent=0 // pred_fallthru
    _
  // Predicated region
  $region26: #{matmul_scale_bias.1} parent=0 // pred_check
    _
  $region27: #{matmul_scale_bias.1} parent=0 // pred_check_branch
    %1673 = sbr.rel (0) target = $region29
  $region28: #{matmul_scale_bias.1} parent=0 // pred_region
    _
  $region29: #{matmul_scale_bias.1} parent=0 // pred_fallthru
    _
  // Predicated region
  $region30: #{matmul_scale_bias.1} parent=0 // pred_check
    _
  $region31: #{matmul_scale_bias.1} parent=0 // pred_check_branch
    %1675 = sbr.rel (0) target = $region33
  $region32: #{matmul_scale_bias.1} parent=0 // pred_region
    _
  $region33: #{matmul_scale_bias.1} parent=0 // pred_fallthru
    _

</llo_original>
